<compile_context>
chip_gen: v6e
topology: v6e:2x2x1
jax: 0.10.0
libtpu: 0.0.40
codegen_flags: <defaults>
</compile_context>

<pallas_src>
import functools
import math

import jax
import jax.numpy as jnp
from jax.experimental import pallas as pl
from jax.experimental.pallas import tpu as pltpu

_PACK = 4  # tokens per packed row -> stored last dim = _PACK * out_dim = 128


def _pos_emb_kernel(x_ref, w1_ref, w2_ref, o_ref):
    # x_ref : (bm, _PACK*in_dim)            packed tokens
    # w1_ref: (_PACK*in_dim,  _PACK*hidden) block-diag kron(I, W1.T)
    # w2_ref: (_PACK*hidden, _PACK*out_dim) block-diag kron(I, W2.T)
    # o_ref : (bm, _PACK*out_dim)           lane-dense (128-wide) output rows
    h = jnp.dot(x_ref[...], w1_ref[...], preferred_element_type=jnp.float32)
    h = jnp.maximum(h, 0.0)
    out = jnp.dot(h.astype(w2_ref.dtype), w2_ref[...],
                  preferred_element_type=jnp.float32)
    o_ref[...] = out.astype(o_ref.dtype)


def pack_position_embedding_weights(w1, w2, pack=_PACK):
    """Build the packed (pre-transposed, block-diagonal) weights ONCE.

    w1: (hidden, in_dim)  = nn.Linear(in_dim, hidden).weight
    w2: (out_dim, hidden) = nn.Linear(hidden, out_dim).weight
    returns:
      w1p: (pack*in_dim,  pack*hidden)
      w2p: (pack*hidden, pack*out_dim)
    """
    eye = jnp.eye(pack, dtype=w1.dtype)
    w1p = jnp.kron(eye, w1.T)
    w2p = jnp.kron(eye, w2.T)
    return w1p, w2p


def position_embedding_packed(x, w1p, w2p, *, block_tokens=4096,
                              min_tokens_for_pallas=512):
    """Forward pass given pre-packed weights. x: (..., in_dim) -> (..., out_dim)."""
    pack = _PACK
    in_dim = w1p.shape[0] // pack
    hidden = w1p.shape[1] // pack
    out_dim = w2p.shape[1] // pack
    assert x.shape[-1] == in_dim

    lead = x.shape[:-1]
    m = math.prod(lead) if lead else 1
    x2 = x.reshape(m, in_dim)

    # ---- small-M fallback: pallas_call launch + tile padding dwarfs the work ----
    if m < min_tokens_for_pallas:
        w1t = w1p[:in_dim, :hidden]   # == W1.T
        w2t = w2p[:hidden, :out_dim]  # == W2.T
        out2 = jnp.maximum(x2 @ w1t, 0.0) @ w2t
        return out2.reshape(*lead, out_dim)

    # Pad token count to a multiple of pack*8 so packed-row blocks satisfy the
    # (8, 128) sublane/lane tiling rule. Padded rows are zeros -> zero outputs,
    # sliced off below.
    row_mult = pack * 8
    m_pad = ((m + row_mult - 1) // row_mult) * row_mult
    if m_pad != m:
        x2 = jnp.pad(x2, ((0, m_pad - m), (0, 0)))

    mp = m_pad // pack                       # number of packed rows
    xp = x2.reshape(mp, pack * in_dim)       # free (contiguous) reshape

    # Large tiles: amortize per-grid-step overhead; keep a multiple of 8 sublanes.
    bm = max(8, (block_tokens // pack) // 8 * 8)
    bm = min(bm, mp)
    grid = (pl.cdiv(mp, bm),)

    out_p = pl.pallas_call(
        _pos_emb_kernel,
        out_shape=jax.ShapeDtypeStruct((mp, pack * out_dim), x.dtype),
        grid_spec=pltpu.PrefetchScalarGridSpec(
            num_scalar_prefetch=0,
            grid=grid,
            in_specs=[
                pl.BlockSpec((bm, pack * in_dim), lambda i: (i, 0)),
                # Constant block index -> weights stay VMEM-resident across steps.
                pl.BlockSpec((pack * in_dim, pack * hidden), lambda i: (0, 0)),
                pl.BlockSpec((pack * hidden, pack * out_dim), lambda i: (0, 0)),
            ],
            out_specs=pl.BlockSpec((bm, pack * out_dim), lambda i: (i, 0)),
        ),
        compiler_params=pltpu.CompilerParams(
            dimension_semantics=("parallel",),  # token axis shards across TCs (v7x)
        ),
    )(xp, w1p, w2p)

    out2 = out_p.reshape(m_pad, out_dim)     # free reshape back to token-major
    if m_pad != m:
        out2 = out2[:m]
    return out2.reshape(*lead, out_dim)


def position_embedding(x, w1, w2, *, block_tokens=4096, min_tokens_for_pallas=512):
    """Convenience wrapper taking raw nn.Linear weights.

    For repeated calls, precompute with pack_position_embedding_weights() and call
    position_embedding_packed() directly (keeps the transpose/packing off the hot path).
    """
    w1p, w2p = pack_position_embedding_weights(w1, w2)
    return position_embedding_packed(x, w1p, w2p, block_tokens=block_tokens,
                                     min_tokens_for_pallas=min_tokens_for_pallas)


if __name__ == "__main__":
    in_dim, out_dim = 4, 32
    hidden = out_dim // 2

    key = jax.random.PRNGKey(0)
    kx, k1, k2, ks = jax.random.split(key, 4)

    # nn.Linear weight shapes: (out_features, in_features)
    w1 = jax.random.normal(k1, (hidden, in_dim), dtype=jnp.float32) * 0.1
    w2 = jax.random.normal(k2, (out_dim, hidden), dtype=jnp.float32) * 0.1

    # ---- main case: big enough to hit the Pallas path with a multi-step grid ----
    batch, nodes = 2, 4096            # M = 8192 tokens -> 2 grid steps at 4096/tile
    x = jax.random.normal(kx, (batch, nodes, in_dim), dtype=jnp.float32)

    w1p, w2p = pack_position_embedding_weights(w1, w2)   # hoisted, done once
    fwd = jax.jit(functools.partial(position_embedding_packed, block_tokens=4096))
    out = jax.block_until_ready(fwd(x, w1p, w2p))

    ref = jnp.maximum(x @ w1.T, 0.0) @ w2.T
    assert out.shape == (batch, nodes, out_dim), out.shape
    assert jnp.allclose(out, ref, atol=1e-4, rtol=1e-4), "f32 mismatch vs reference"

    # ---- original demo shape (batch=2, seq=8): exercises the small-M XLA fallback ----
    xs = jax.random.normal(ks, (2, 8, in_dim), dtype=jnp.float32)
    outs = jax.block_until_ready(position_embedding(xs, w1, w2))
    refs = jnp.maximum(xs @ w1.T, 0.0) @ w2.T
    assert outs.shape == (2, 8, out_dim), outs.shape
    assert jnp.allclose(outs, refs, atol=1e-4, rtol=1e-4), "small-M mismatch"

    # ---- bf16 I/O (v6e/v7x HBM-bandwidth saver): f32 accumulation in-kernel ----
    xb = x.astype(jnp.bfloat16)
    w1pb, w2pb = w1p.astype(jnp.bfloat16), w2p.astype(jnp.bfloat16)
    outb = jax.block_until_ready(fwd(xb, w1pb, w2pb))
    assert outb.dtype == jnp.bfloat16
    assert jnp.allclose(outb.astype(jnp.float32), ref, atol=3e-2, rtol=3e-2), \
        "bf16 mismatch vs reference"

    print("KERNEL_OK")
</pallas_src>

<mosaic_0001>
module attributes {stable_mosaic.version = 11 : i64} {
  func.func @_pos_emb_kernel(%arg0: i32, %arg1: memref<1024x16xf32, #tpu.memory_space<vmem>>, %arg2: memref<16x64xf32, #tpu.memory_space<vmem>>, %arg3: memref<64x128xf32, #tpu.memory_space<vmem>>, %arg4: memref<1024x128xf32, #tpu.memory_space<vmem>>) attributes {dimension_semantics = [#tpu.dimension_semantics<parallel>], iteration_bounds = array<i64: 2>, scalar_prefetch = 0 : i64, scratch_operands = 0 : i64, tpu.core_type = #tpu.core_type<tc>, window_params = [{transform_indices = @transform_0, window_bounds = array<i64: 1024, 16>}, {pipeline_mode = #tpu.pipeline_mode<synchronous>, transform_indices = @transform_1, window_bounds = array<i64: 16, 64>}, {pipeline_mode = #tpu.pipeline_mode<synchronous>, transform_indices = @transform_2, window_bounds = array<i64: 64, 128>}, {transform_indices = @transform_3, window_bounds = array<i64: 1024, 128>}]} {
    %c0 = arith.constant 0 : index
    %c0_0 = arith.constant 0 : index
    %0 = vector.load %arg1[%c0, %c0_0] : memref<1024x16xf32, #tpu.memory_space<vmem>>, vector<1024x16xf32>
    %c0_1 = arith.constant 0 : index
    %c0_2 = arith.constant 0 : index
    %1 = vector.load %arg2[%c0_1, %c0_2] : memref<16x64xf32, #tpu.memory_space<vmem>>, vector<16x64xf32>
    %cst = arith.constant dense<0.000000e+00> : vector<1024x64xf32>
    %2 = tpu.matmul %0, %1, %cst {dimension_numbers = #tpu.dot_dimension_numbers<[1], [0], [0], [1], [0, 0, 1, 1], [], []>} : vector<1024x16xf32>, vector<16x64xf32>, vector<1024x64xf32> -> vector<1024x64xf32>
    %cst_3 = arith.constant 0.000000e+00 : f32
    %3 = vector.broadcast %cst_3 : f32 to vector<1024x64xf32>
    %4 = arith.maximumf %2, %3 : vector<1024x64xf32>
    %c0_4 = arith.constant 0 : index
    %c0_5 = arith.constant 0 : index
    %5 = vector.load %arg3[%c0_4, %c0_5] : memref<64x128xf32, #tpu.memory_space<vmem>>, vector<64x128xf32>
    %cst_6 = arith.constant dense<0.000000e+00> : vector<1024x128xf32>
    %6 = tpu.matmul %4, %5, %cst_6 {dimension_numbers = #tpu.dot_dimension_numbers<[1], [0], [0], [1], [0, 0, 1, 1], [], []>} : vector<1024x64xf32>, vector<64x128xf32>, vector<1024x128xf32> -> vector<1024x128xf32>
    %c0_7 = arith.constant 0 : index
    %c0_8 = arith.constant 0 : index
    %7 = vector.load %arg4[%c0_7, %c0_8] : memref<1024x128xf32, #tpu.memory_space<vmem>>, vector<1024x128xf32>
    tpu.vector_store %arg4[%c0_7, %c0_8], %6 {strides = array<i32>} : memref<1024x128xf32, #tpu.memory_space<vmem>>, vector<1024x128xf32>,
    return
  }
  func.func @transform_0(%arg0: i32) -> (i32, i32) {
    %c0_i32 = arith.constant 0 : i32
    %c0_i32_0 = arith.constant 0 : i32
    return %arg0, %c0_i32 : i32, i32
  }
  func.func @transform_1(%arg0: i32) -> (i32, i32) {
    %c0_i32 = arith.constant 0 : i32
    %c0_i32_0 = arith.constant 0 : i32
    %c0_i32_1 = arith.constant 0 : i32
    return %c0_i32, %c0_i32_0 : i32, i32
  }
  func.func @transform_2(%arg0: i32) -> (i32, i32) {
    %c0_i32 = arith.constant 0 : i32
    %c0_i32_0 = arith.constant 0 : i32
    %c0_i32_1 = arith.constant 0 : i32
    return %c0_i32, %c0_i32_0 : i32, i32
  }
  func.func @transform_3(%arg0: i32) -> (i32, i32) {
    %c0_i32 = arith.constant 0 : i32
    %c0_i32_0 = arith.constant 0 : i32
    return %arg0, %c0_i32 : i32, i32
  }
}

</mosaic_0001>

<llo_original>
// kernel: position_embedding_packed.1
$region0: #{position_embedding_packed.1}
  #allocation0 [shape = 'u32[]', space=smem, size = 0x4, offset = 0x4, fixed_abs, tag = 'smem constant byte address 0x4 - core index']
  #allocation1 [shape = 'u32[144,128]{1,0:T(1,128)}', space=vmem, size = 0x12000, scoped, tag = 'internal scratch']
  %s0 = inlined_call_operand.vmem [shape: f32[2048,16], index: 0, kind: input, shape index: {}]
  %s1 = inlined_call_operand.vmem [shape: f32[16,64], index: 1, kind: input, shape index: {}]
  %s2 = inlined_call_operand.vmem [shape: f32[64,128], index: 2, kind: input, shape index: {}]
  %s3 = inlined_call_operand.vmem [shape: f32[2048,128], index: 3, kind: output, shape index: {}]
  %s4 = sld [smem:[#allocation0]]
  $region45: #{position_embedding_packed.1} parent=0
    _
  %s6 = ssub.s32 1, %s4
  %s7 = scalar_select 0, %s6, %s4
  loop: start=0, step=1, limit=4
  $region2: #{position_embedding_packed.1} parent=0 // loop_pre_header
    _
  $region3: #{position_embedding_packed.1} parent=0 // loop_header
    %s9 = sphi 0, %s13
    %p10 = scmp.ge.s32.totalorder %s9, 4
    %s19 = sphi 0, %s21
    %s22 = sphi 0, %s19
    %s23 = sphi 0, %s22
    %s39 = sphi 0, %s23
    %s43 = sphi 0, %s43
    %s45 = sphi 0, %s43
    %s46 = sphi 0, %s45
    %s60 = sphi 0, %s46
    %s64 = sphi 0, %s64
    %s66 = sphi 0, %s64
    %s67 = sphi 0, %s66
    %s81 = sphi 0, %s67
    %s87 = sphi 0, %s89
    %s90 = sphi 0, %s87
    %s91 = sphi 0, %s90
    %s107 = sphi 0, %s91
  $region4: #{position_embedding_packed.1} parent=0 // loop_header_branch
    %12 = sbr.rel (%p10) target = $region8
  $region5: #{position_embedding_packed.1} parent=0 // loop_body
    %s14 = ssub.s32 %s9, 1
    %s15 = ssub.s32 %s9, 2
    %s16 = sadd.s32 %s9, 1
    %s17 = ssub.s32 %s9, %s16
    %p18 = scmp.eq.s32.totalorder %s17, 0
    %s20 = sadd.s32 %s19, 1
    %s21 = scalar_select %p18, %s19, %s20
    %p24 = pneg %p18
    %p25 = scmp.eq.s32.totalorder %s9, 1
    %p26 = por %p24, %p25
    %p27 = scmp.ne.s32.totalorder %s19, %s22
    %p28 = scmp.eq.s32.totalorder %s9, 0
    %p29 = por %p27, %p28
    %p30 = scmp.ne.s32.totalorder %s19, %s22
    %p31 = scmp.eq.s32.totalorder %s14, 1
    %p32 = por %p30, %p31
    %p33 = scmp.ne.s32.totalorder %s22, %s23
    %p34 = scmp.eq.s32.totalorder %s14, 0
    %p35 = por %p33, %p34
    %p36 = scmp.ne.s32.totalorder %s22, %s23
    %p37 = scmp.eq.s32.totalorder %s15, 1
    %p38 = por %p36, %p37
    %p40 = scmp.ne.s32.totalorder %s23, %s39
    %p41 = scmp.eq.s32.totalorder %s15, 0
    %p42 = por %p40, %p41
    %s44 = sadd.s32 %s43, 1
    %p47 = scmp.eq.s32.totalorder %s9, 1
    %p48 = scmp.ne.s32.totalorder %s43, %s45
    %p49 = scmp.eq.s32.totalorder %s9, 0
    %p50 = por %p48, %p49
    %p51 = scmp.ne.s32.totalorder %s43, %s45
    %p52 = scmp.eq.s32.totalorder %s14, 1
    %p53 = por %p51, %p52
    %p54 = scmp.ne.s32.totalorder %s45, %s46
    %p55 = scmp.eq.s32.totalorder %s14, 0
    %p56 = por %p54, %p55
    %p57 = scmp.ne.s32.totalorder %s45, %s46
    %p58 = scmp.eq.s32.totalorder %s15, 1
    %p59 = por %p57, %p58
    %p61 = scmp.ne.s32.totalorder %s46, %s60
    %p62 = scmp.eq.s32.totalorder %s15, 0
    %p63 = por %p61, %p62
    %s65 = sadd.s32 %s64, 1
    %p68 = scmp.eq.s32.totalorder %s9, 1
    %p69 = scmp.ne.s32.totalorder %s64, %s66
    %p70 = scmp.eq.s32.totalorder %s9, 0
    %p71 = por %p69, %p70
    %p72 = scmp.ne.s32.totalorder %s64, %s66
    %p73 = scmp.eq.s32.totalorder %s14, 1
    %p74 = por %p72, %p73
    %p75 = scmp.ne.s32.totalorder %s66, %s67
    %p76 = scmp.eq.s32.totalorder %s14, 0
    %p77 = por %p75, %p76
    %p78 = scmp.ne.s32.totalorder %s66, %s67
    %p79 = scmp.eq.s32.totalorder %s15, 1
    %p80 = por %p78, %p79
    %p82 = scmp.ne.s32.totalorder %s67, %s81
    %p83 = scmp.eq.s32.totalorder %s15, 0
    %p84 = por %p82, %p83
    %s85 = ssub.s32 %s9, %s16
    %p86 = scmp.eq.s32.totalorder %s85, 0
    %s88 = sadd.s32 %s87, 1
    %s89 = scalar_select %p86, %s87, %s88
    %p92 = pneg %p86
    %p93 = scmp.eq.s32.totalorder %s9, 1
    %p94 = por %p92, %p93
    %p95 = scmp.ne.s32.totalorder %s87, %s90
    %p96 = scmp.eq.s32.totalorder %s9, 0
    %p97 = por %p95, %p96
    %p98 = scmp.ne.s32.totalorder %s87, %s90
    %p99 = scmp.eq.s32.totalorder %s14, 1
    %p100 = por %p98, %p99
    %p101 = scmp.ne.s32.totalorder %s90, %s91
    %p102 = scmp.eq.s32.totalorder %s14, 0
    %p103 = por %p101, %p102
    %p104 = scmp.ne.s32.totalorder %s90, %s91
    %p105 = scmp.eq.s32.totalorder %s15, 1
    %p106 = por %p104, %p105
    %p108 = scmp.ne.s32.totalorder %s91, %s107
    %p109 = scmp.eq.s32.totalorder %s15, 0
    %p110 = por %p108, %p109
    %p111 = scmp.le.s32.totalorder 1, %s9
    %p112 = scmp.lt.s32.totalorder %s9, 3
    %p113 = pnand %p111, %p112
    %p114 = pneg %p113
    // Predicated region
    $region9: #{position_embedding_packed.1} parent=5 // pred_check
      _
    $region10: #{position_embedding_packed.1} parent=5 // pred_check_branch
      %116 = sbr.rel (%p113) target = $region12
    $region11: #{position_embedding_packed.1} parent=5 // pred_region
      %s117 = ssub.s32 %s9, 1
      // Predicated region
      $region13: #{position_embedding_packed.1} parent=11 // pred_check
        %p118 = pneg %p56
      $region14: #{position_embedding_packed.1} parent=11 // pred_check_branch
        %120 = sbr.rel (%p118) target = $region16
      $region15: #{position_embedding_packed.1} parent=11 // pred_region
        _
      $region16: #{position_embedding_packed.1} parent=11 // pred_fallthru
        _
      // Predicated region
      $region17: #{position_embedding_packed.1} parent=11 // pred_check
        %p121 = pneg %p77
      $region18: #{position_embedding_packed.1} parent=11 // pred_check_branch
        %123 = sbr.rel (%p121) target = $region20
      $region19: #{position_embedding_packed.1} parent=11 // pred_region
        _
      $region20: #{position_embedding_packed.1} parent=11 // pred_fallthru
        _
    $region12: #{position_embedding_packed.1} parent=5 // pred_fallthru
      _
    %p124 = scmp.lt.s32.totalorder %s9, 2
    // Predicated region
    $region21: #{position_embedding_packed.1} parent=5 // pred_check
      %p125 = pneg %p124
    $region22: #{position_embedding_packed.1} parent=5 // pred_check_branch
      %127 = sbr.rel (%p125) target = $region24
    $region23: #{position_embedding_packed.1} parent=5 // pred_region
      // Predicated region
      $region25: #{position_embedding_packed.1} parent=23 // pred_check
        %p128 = pneg %p29
      $region26: #{position_embedding_packed.1} parent=23 // pred_check_branch
        %130 = sbr.rel (%p128) target = $region28
      $region27: #{position_embedding_packed.1} parent=23 // pred_region
        %s131 = smul.u32 128, %s9
        %p132 = scmp.lt.s32.totalorder %s131, 255
        %s133 = scalar_select %p132, %s131, 255
        %s134 = smul.addr %s133, 8
        %s135 = scalar_lea.vmem %s0, %s134
        %s136 = smul.u32 128, %s9
      $region28: #{position_embedding_packed.1} parent=23 // pred_fallthru
        _
    $region24: #{position_embedding_packed.1} parent=5 // pred_fallthru
      _
    %p137 = scmp.le.s32.totalorder 1, %s9
    %p138 = scmp.lt.s32.totalorder %s9, 3
    %p139 = pnand %p137, %p138
    %p140 = pneg %p139
    // Predicated region
    $region29: #{position_embedding_packed.1} parent=5 // pred_check
      _
    $region30: #{position_embedding_packed.1} parent=5 // pred_check_branch
      %142 = sbr.rel (%p139) target = $region32
    $region31: #{position_embedding_packed.1} parent=5 // pred_region
      %s143 = ssub.s32 %s9, 1
      %s144 = smul.u32 128, %s14
      %p145 = scmp.lt.s32.totalorder %s144, 255
      %s146 = scalar_select %p145, %s144, 255
      %s147 = smul.addr %s146, 8
      %s148 = scalar_lea.vmem %s0, %s147
      %p149 = pneg %p35
      %p150 = pneg %p32
      %p151 = pneg %p56
      %p152 = pneg %p53
      %p153 = pneg %p77
      %p154 = pneg %p74
      %p155 = pneg %p103
      %p156 = pneg %p100
      %s157 = smul.u32 128, %s14
      %p158 = scmp.lt.s32.totalorder %s157, 255
      %s159 = scalar_select %p158, %s157, 255
      %s160 = smul.addr %s159, 8
      %s161 = scalar_lea.vmem %s3, %s160
      %s162 = smul.u32 128, %s14
      %p163 = scmp.lt.s32.totalorder %s162, 255
      %s164 = scalar_select %p163, %s162, 255
      %s165 = smul.addr %s164, 8
      %s166 = scalar_lea.vmem %s0, %s165
      %s167 = smul.u32 128, %s14
      %s168 = smul.u32 128, %s14
      %p169 = scmp.lt.s32.totalorder %s168, 255
      %s170 = scalar_select %p169, %s168, 255
      %s171 = smul.addr %s170, 8
      %s172 = scalar_lea.vmem %s3, %s171
      %s173 = smul.u32 128, %s14
      %v174 = vld [vmem:[%s166] sm:$0xff]
      %v175 = vld [vmem:[%s166 + $0x8] sm:$0xff]
      %v176 = vld [vmem:[%s166 + $0x10] sm:$0xff]
      %v177 = vld [vmem:[%s166 + $0x18] sm:$0xff]
      %v178 = vld [vmem:[%s166 + $0x20] sm:$0xff]
      %v179 = vld [vmem:[%s166 + $0x28] sm:$0xff]
      %v180 = vld [vmem:[%s166 + $0x30] sm:$0xff]
      %v181 = vld [vmem:[%s166 + $0x38] sm:$0xff]
      %v182 = vld [vmem:[%s166 + $0x40] sm:$0xff]
      %v183 = vld [vmem:[%s166 + $0x48] sm:$0xff]
      %v184 = vld [vmem:[%s166 + $0x50] sm:$0xff]
      %v185 = vld [vmem:[%s166 + $0x58] sm:$0xff]
      %v186 = vld [vmem:[%s166 + $0x60] sm:$0xff]
      %v187 = vld [vmem:[%s166 + $0x68] sm:$0xff]
      %v188 = vld [vmem:[%s166 + $0x70] sm:$0xff]
      %v189 = vld [vmem:[%s166 + $0x78] sm:$0xff]
      %v190 = vld [vmem:[%s166 + $0x80] sm:$0xff]
      %v191 = vld [vmem:[%s166 + $0x88] sm:$0xff]
      %v192 = vld [vmem:[%s166 + $0x90] sm:$0xff]
      %v193 = vld [vmem:[%s166 + $0x98] sm:$0xff]
      %v194 = vld [vmem:[%s166 + $0xa0] sm:$0xff]
      %v195 = vld [vmem:[%s166 + $0xa8] sm:$0xff]
      %v196 = vld [vmem:[%s166 + $0xb0] sm:$0xff]
      %v197 = vld [vmem:[%s166 + $0xb8] sm:$0xff]
      %v198 = vld [vmem:[%s166 + $0xc0] sm:$0xff]
      %v199 = vld [vmem:[%s166 + $0xc8] sm:$0xff]
      %v200 = vld [vmem:[%s166 + $0xd0] sm:$0xff]
      %v201 = vld [vmem:[%s166 + $0xd8] sm:$0xff]
      %v202 = vld [vmem:[%s166 + $0xe0] sm:$0xff]
      %v203 = vld [vmem:[%s166 + $0xe8] sm:$0xff]
      %v204 = vld [vmem:[%s166 + $0xf0] sm:$0xff]
      %v205 = vld [vmem:[%s166 + $0xf8] sm:$0xff]
      %v206 = vld [vmem:[%s166 + $0x100] sm:$0xff]
      %v207 = vld [vmem:[%s166 + $0x108] sm:$0xff]
      %v208 = vld [vmem:[%s166 + $0x110] sm:$0xff]
      %v209 = vld [vmem:[%s166 + $0x118] sm:$0xff]
      %v210 = vld [vmem:[%s166 + $0x120] sm:$0xff]
      %v211 = vld [vmem:[%s166 + $0x128] sm:$0xff]
      %v212 = vld [vmem:[%s166 + $0x130] sm:$0xff]
      %v213 = vld [vmem:[%s166 + $0x138] sm:$0xff]
      %v214 = vld [vmem:[%s166 + $0x140] sm:$0xff]
      %v215 = vld [vmem:[%s166 + $0x148] sm:$0xff]
      %v216 = vld [vmem:[%s166 + $0x150] sm:$0xff]
      %v217 = vld [vmem:[%s166 + $0x158] sm:$0xff]
      %v218 = vld [vmem:[%s166 + $0x160] sm:$0xff]
      %v219 = vld [vmem:[%s166 + $0x168] sm:$0xff]
      %v220 = vld [vmem:[%s166 + $0x170] sm:$0xff]
      %v221 = vld [vmem:[%s166 + $0x178] sm:$0xff]
      %v222 = vld [vmem:[%s166 + $0x180] sm:$0xff]
      %v223 = vld [vmem:[%s166 + $0x188] sm:$0xff]
      %v224 = vld [vmem:[%s166 + $0x190] sm:$0xff]
      %v225 = vld [vmem:[%s166 + $0x198] sm:$0xff]
      %v226 = vld [vmem:[%s166 + $0x1a0] sm:$0xff]
      %v227 = vld [vmem:[%s166 + $0x1a8] sm:$0xff]
      %v228 = vld [vmem:[%s166 + $0x1b0] sm:$0xff]
      %v229 = vld [vmem:[%s166 + $0x1b8] sm:$0xff]
      %v230 = vld [vmem:[%s166 + $0x1c0] sm:$0xff]
      %v231 = vld [vmem:[%s166 + $0x1c8] sm:$0xff]
      %v232 = vld [vmem:[%s166 + $0x1d0] sm:$0xff]
      %v233 = vld [vmem:[%s166 + $0x1d8] sm:$0xff]
      %v234 = vld [vmem:[%s166 + $0x1e0] sm:$0xff]
      %v235 = vld [vmem:[%s166 + $0x1e8] sm:$0xff]
      %v236 = vld [vmem:[%s166 + $0x1f0] sm:$0xff]
      %v237 = vld [vmem:[%s166 + $0x1f8] sm:$0xff]
      %v238 = vld [vmem:[%s166 + $0x200] sm:$0xff]
      %v239 = vld [vmem:[%s166 + $0x208] sm:$0xff]
      %v240 = vld [vmem:[%s166 + $0x210] sm:$0xff]
      %v241 = vld [vmem:[%s166 + $0x218] sm:$0xff]
      %v242 = vld [vmem:[%s166 + $0x220] sm:$0xff]
      %v243 = vld [vmem:[%s166 + $0x228] sm:$0xff]
      %v244 = vld [vmem:[%s166 + $0x230] sm:$0xff]
      %v245 = vld [vmem:[%s166 + $0x238] sm:$0xff]
      %v246 = vld [vmem:[%s166 + $0x240] sm:$0xff]
      %v247 = vld [vmem:[%s166 + $0x248] sm:$0xff]
      %v248 = vld [vmem:[%s166 + $0x250] sm:$0xff]
      %v249 = vld [vmem:[%s166 + $0x258] sm:$0xff]
      %v250 = vld [vmem:[%s166 + $0x260] sm:$0xff]
      %v251 = vld [vmem:[%s166 + $0x268] sm:$0xff]
      %v252 = vld [vmem:[%s166 + $0x270] sm:$0xff]
      %v253 = vld [vmem:[%s166 + $0x278] sm:$0xff]
      %v254 = vld [vmem:[%s166 + $0x280] sm:$0xff]
      %v255 = vld [vmem:[%s166 + $0x288] sm:$0xff]
      %v256 = vld [vmem:[%s166 + $0x290] sm:$0xff]
      %v257 = vld [vmem:[%s166 + $0x298] sm:$0xff]
      %v258 = vld [vmem:[%s166 + $0x2a0] sm:$0xff]
      %v259 = vld [vmem:[%s166 + $0x2a8] sm:$0xff]
      %v260 = vld [vmem:[%s166 + $0x2b0] sm:$0xff]
      %v261 = vld [vmem:[%s166 + $0x2b8] sm:$0xff]
      %v262 = vld [vmem:[%s166 + $0x2c0] sm:$0xff]
      %v263 = vld [vmem:[%s166 + $0x2c8] sm:$0xff]
      %v264 = vld [vmem:[%s166 + $0x2d0] sm:$0xff]
      %v265 = vld [vmem:[%s166 + $0x2d8] sm:$0xff]
      %v266 = vld [vmem:[%s166 + $0x2e0] sm:$0xff]
      %v267 = vld [vmem:[%s166 + $0x2e8] sm:$0xff]
      %v268 = vld [vmem:[%s166 + $0x2f0] sm:$0xff]
      %v269 = vld [vmem:[%s166 + $0x2f8] sm:$0xff]
      %v270 = vld [vmem:[%s166 + $0x300] sm:$0xff]
      %v271 = vld [vmem:[%s166 + $0x308] sm:$0xff]
      %v272 = vld [vmem:[%s166 + $0x310] sm:$0xff]
      %v273 = vld [vmem:[%s166 + $0x318] sm:$0xff]
      %v274 = vld [vmem:[%s166 + $0x320] sm:$0xff]
      %v275 = vld [vmem:[%s166 + $0x328] sm:$0xff]
      %v276 = vld [vmem:[%s166 + $0x330] sm:$0xff]
      %v277 = vld [vmem:[%s166 + $0x338] sm:$0xff]
      %v278 = vld [vmem:[%s166 + $0x340] sm:$0xff]
      %v279 = vld [vmem:[%s166 + $0x348] sm:$0xff]
      %v280 = vld [vmem:[%s166 + $0x350] sm:$0xff]
      %v281 = vld [vmem:[%s166 + $0x358] sm:$0xff]
      %v282 = vld [vmem:[%s166 + $0x360] sm:$0xff]
      %v283 = vld [vmem:[%s166 + $0x368] sm:$0xff]
      %v284 = vld [vmem:[%s166 + $0x370] sm:$0xff]
      %v285 = vld [vmem:[%s166 + $0x378] sm:$0xff]
      %v286 = vld [vmem:[%s166 + $0x380] sm:$0xff]
      %v287 = vld [vmem:[%s166 + $0x388] sm:$0xff]
      %v288 = vld [vmem:[%s166 + $0x390] sm:$0xff]
      %v289 = vld [vmem:[%s166 + $0x398] sm:$0xff]
      %v290 = vld [vmem:[%s166 + $0x3a0] sm:$0xff]
      %v291 = vld [vmem:[%s166 + $0x3a8] sm:$0xff]
      %v292 = vld [vmem:[%s166 + $0x3b0] sm:$0xff]
      %v293 = vld [vmem:[%s166 + $0x3b8] sm:$0xff]
      %v294 = vld [vmem:[%s166 + $0x3c0] sm:$0xff]
      %v295 = vld [vmem:[%s166 + $0x3c8] sm:$0xff]
      %v296 = vld [vmem:[%s166 + $0x3d0] sm:$0xff]
      %v297 = vld [vmem:[%s166 + $0x3d8] sm:$0xff]
      %v298 = vld [vmem:[%s166 + $0x3e0] sm:$0xff]
      %v299 = vld [vmem:[%s166 + $0x3e8] sm:$0xff]
      %v300 = vld [vmem:[%s166 + $0x3f0] sm:$0xff]
      %v301 = vld [vmem:[%s166 + $0x3f8] sm:$0xff]
      %v302 = vld [vmem:[%s1] sm:$0xff]
      %v303 = vld [vmem:[%s1 + $0x8] sm:$0xff]
      %vm304 = vcmask 130048
      %v306 = vsel %vm304, %v174, 0
      %v309 = vsel %vm304, %v175, 0
      %v312 = vsel %vm304, %v176, 0
      %v315 = vsel %vm304, %v177, 0
      %v318 = vsel %vm304, %v178, 0
      %v321 = vsel %vm304, %v179, 0
      %v324 = vsel %vm304, %v180, 0
      %v327 = vsel %vm304, %v181, 0
      %v330 = vsel %vm304, %v182, 0
      %v333 = vsel %vm304, %v183, 0
      %v336 = vsel %vm304, %v184, 0
      %v339 = vsel %vm304, %v185, 0
      %v342 = vsel %vm304, %v186, 0
      %v345 = vsel %vm304, %v187, 0
      %v348 = vsel %vm304, %v188, 0
      %v351 = vsel %vm304, %v189, 0
      %v354 = vsel %vm304, %v190, 0
      %v357 = vsel %vm304, %v191, 0
      %v360 = vsel %vm304, %v192, 0
      %v363 = vsel %vm304, %v193, 0
      %v366 = vsel %vm304, %v194, 0
      %v369 = vsel %vm304, %v195, 0
      %v372 = vsel %vm304, %v196, 0
      %v375 = vsel %vm304, %v197, 0
      %v378 = vsel %vm304, %v198, 0
      %v381 = vsel %vm304, %v199, 0
      %v384 = vsel %vm304, %v200, 0
      %v387 = vsel %vm304, %v201, 0
      %v390 = vsel %vm304, %v202, 0
      %v393 = vsel %vm304, %v203, 0
      %v396 = vsel %vm304, %v204, 0
      %v399 = vsel %vm304, %v205, 0
      %v402 = vsel %vm304, %v206, 0
      %v405 = vsel %vm304, %v207, 0
      %v408 = vsel %vm304, %v208, 0
      %v411 = vsel %vm304, %v209, 0
      %v414 = vsel %vm304, %v210, 0
      %v417 = vsel %vm304, %v211, 0
      %v420 = vsel %vm304, %v212, 0
      %v423 = vsel %vm304, %v213, 0
      %v426 = vsel %vm304, %v214, 0
      %v429 = vsel %vm304, %v215, 0
      %v432 = vsel %vm304, %v216, 0
      %v435 = vsel %vm304, %v217, 0
      %v438 = vsel %vm304, %v218, 0
      %v441 = vsel %vm304, %v219, 0
      %v444 = vsel %vm304, %v220, 0
      %v447 = vsel %vm304, %v221, 0
      %v450 = vsel %vm304, %v222, 0
      %v453 = vsel %vm304, %v223, 0
      %v456 = vsel %vm304, %v224, 0
      %v459 = vsel %vm304, %v225, 0
      %v462 = vsel %vm304, %v226, 0
      %v465 = vsel %vm304, %v227, 0
      %v468 = vsel %vm304, %v228, 0
      %v471 = vsel %vm304, %v229, 0
      %v474 = vsel %vm304, %v230, 0
      %v477 = vsel %vm304, %v231, 0
      %v480 = vsel %vm304, %v232, 0
      %v483 = vsel %vm304, %v233, 0
      %v486 = vsel %vm304, %v234, 0
      %v489 = vsel %vm304, %v235, 0
      %v492 = vsel %vm304, %v236, 0
      %v495 = vsel %vm304, %v237, 0
      %v498 = vsel %vm304, %v238, 0
      %v501 = vsel %vm304, %v239, 0
      %v504 = vsel %vm304, %v240, 0
      %v507 = vsel %vm304, %v241, 0
      %v510 = vsel %vm304, %v242, 0
      %v513 = vsel %vm304, %v243, 0
      %v516 = vsel %vm304, %v244, 0
      %v519 = vsel %vm304, %v245, 0
      %v522 = vsel %vm304, %v246, 0
      %v525 = vsel %vm304, %v247, 0
      %v528 = vsel %vm304, %v248, 0
      %v531 = vsel %vm304, %v249, 0
      %v534 = vsel %vm304, %v250, 0
      %v537 = vsel %vm304, %v251, 0
      %v540 = vsel %vm304, %v252, 0
      %v543 = vsel %vm304, %v253, 0
      %v546 = vsel %vm304, %v254, 0
      %v549 = vsel %vm304, %v255, 0
      %v552 = vsel %vm304, %v256, 0
      %v555 = vsel %vm304, %v257, 0
      %v558 = vsel %vm304, %v258, 0
      %v561 = vsel %vm304, %v259, 0
      %v564 = vsel %vm304, %v260, 0
      %v567 = vsel %vm304, %v261, 0
      %v570 = vsel %vm304, %v262, 0
      %v573 = vsel %vm304, %v263, 0
      %v576 = vsel %vm304, %v264, 0
      %v579 = vsel %vm304, %v265, 0
      %v582 = vsel %vm304, %v266, 0
      %v585 = vsel %vm304, %v267, 0
      %v588 = vsel %vm304, %v268, 0
      %v591 = vsel %vm304, %v269, 0
      %v594 = vsel %vm304, %v270, 0
      %v597 = vsel %vm304, %v271, 0
      %v600 = vsel %vm304, %v272, 0
      %v603 = vsel %vm304, %v273, 0
      %v606 = vsel %vm304, %v274, 0
      %v609 = vsel %vm304, %v275, 0
      %v612 = vsel %vm304, %v276, 0
      %v615 = vsel %vm304, %v277, 0
      %v618 = vsel %vm304, %v278, 0
      %v621 = vsel %vm304, %v279, 0
      %v624 = vsel %vm304, %v280, 0
      %v627 = vsel %vm304, %v281, 0
      %v630 = vsel %vm304, %v282, 0
      %v633 = vsel %vm304, %v283, 0
      %v636 = vsel %vm304, %v284, 0
      %v639 = vsel %vm304, %v285, 0
      %v642 = vsel %vm304, %v286, 0
      %v645 = vsel %vm304, %v287, 0
      %v648 = vsel %vm304, %v288, 0
      %v651 = vsel %vm304, %v289, 0
      %v654 = vsel %vm304, %v290, 0
      %v657 = vsel %vm304, %v291, 0
      %v660 = vsel %vm304, %v292, 0
      %v663 = vsel %vm304, %v293, 0
      %v666 = vsel %vm304, %v294, 0
      %v669 = vsel %vm304, %v295, 0
      %v672 = vsel %vm304, %v296, 0
      %v675 = vsel %vm304, %v297, 0
      %v678 = vsel %vm304, %v298, 0
      %v681 = vsel %vm304, %v299, 0
      %v684 = vsel %vm304, %v300, 0
      %v687 = vsel %vm304, %v301, 0
      %689 = vmatprep.subr.mxu0 0.0
      %690 = vmatpush1.msra.mxu0 0.0
      %691 = vmatprep.subr.mxu0 0.0
      %692 = vmatpush1.msra.mxu0 0.0
      %693 = vmatprep.subr.mxu0 0.0
      %694 = vmatpush1.msra.mxu0 0.0
      %695 = vmatprep.subr.mxu0 0.0
      %696 = vmatpush1.msra.mxu0 0.0
      %697 = vmatprep.subr.mxu0 0.0
      %698 = vmatpush1.msra.mxu0 0.0
      %699 = vmatprep.subr.mxu0 0.0
      %700 = vmatpush1.msra.mxu0 0.0
      %701 = vmatprep.subr.mxu0 0.0
      %702 = vmatpush1.msra.mxu0 0.0
      %703 = vmatprep.subr.mxu0 0.0
      %704 = vmatpush1.msra.mxu0 0.0
      %705 = vmatprep.subr.mxu0 0.0
      %706 = vmatpush1.msra.mxu0 0.0
      %707 = vmatprep.subr.mxu0 0.0
      %708 = vmatpush1.msra.mxu0 0.0
      %709 = vmatprep.subr.mxu0 0.0
      %710 = vmatpush1.msra.mxu0 0.0
      %711 = vmatprep.subr.mxu0 0.0
      %712 = vmatpush1.msra.mxu0 0.0
      %713 = vmatprep.subr.mxu0 0.0
      %714 = vmatpush1.msra.mxu0 0.0
      %715 = vmatprep.subr.mxu0 0.0
      %716 = vmatpush1.msra.mxu0 0.0
      %717 = vmatprep.subr.mxu0 0.0
      %718 = vmatpush1.msra.mxu0 %v303
      %719 = vmatprep.subr.mxu0 0.0
      %720 = vmatpush1.msra.mxu0 %v302
      %721 = vmatprep.subr.mxu0 0.0
      %722 = vmatpush2.msra.mxu0 0.0
      %723 = vmatprep.subr.mxu0 0.0
      %724 = vmatpush2.msra.mxu0 0.0
      %725 = vmatprep.subr.mxu0 0.0
      %726 = vmatpush2.msra.mxu0 0.0
      %727 = vmatprep.subr.mxu0 0.0
      %728 = vmatpush2.msra.mxu0 0.0
      %729 = vmatprep.subr.mxu0 0.0
      %730 = vmatpush2.msra.mxu0 0.0
      %731 = vmatprep.subr.mxu0 0.0
      %732 = vmatpush2.msra.mxu0 0.0
      %733 = vmatprep.subr.mxu0 0.0
      %734 = vmatpush2.msra.mxu0 0.0
      %735 = vmatprep.subr.mxu0 0.0
      %736 = vmatpush2.msra.mxu0 0.0
      %737 = vmatprep.subr.mxu0 0.0
      %738 = vmatpush2.msra.mxu0 0.0
      %739 = vmatprep.subr.mxu0 0.0
      %740 = vmatpush2.msra.mxu0 0.0
      %741 = vmatprep.subr.mxu0 0.0
      %742 = vmatpush2.msra.mxu0 0.0
      %743 = vmatprep.subr.mxu0 0.0
      %744 = vmatpush2.msra.mxu0 0.0
      %745 = vmatprep.subr.mxu0 0.0
      %746 = vmatpush2.msra.mxu0 0.0
      %747 = vmatprep.subr.mxu0 0.0
      %748 = vmatpush2.msra.mxu0 0.0
      %749 = vmatprep.subr.mxu0 0.0
      %750 = vmatpush2.msra.mxu0 0.0
      %751 = vmatprep.subr.mxu0 0.0
      %752 = vmatpush2.msra.mxu0 0.0
      %753 = vmatprep.mubr.f32.mxu0 0.0
      %754 = vmatmul.mubr.f32.gmra.mxu0 %v306
      %v755 = vpop.f32.mrf.mxu0
      %v756 = vadd.f32 0.0, %v755
      %v757 = vpop.f32.mrf.mxu0
      %758 = vmatprep.mubr.f32.mxu0 0.0
      %759 = vmatmul.mubr.f32.gmra.mxu0 %v309
      %v760 = vpop.f32.mrf.mxu0
      %v761 = vadd.f32 0.0, %v760
      %v762 = vpop.f32.mrf.mxu0
      %763 = vmatprep.mubr.f32.mxu0 0.0
      %764 = vmatmul.mubr.f32.gmra.mxu0 %v312
      %v765 = vpop.f32.mrf.mxu0
      %v766 = vadd.f32 0.0, %v765
      %v767 = vpop.f32.mrf.mxu0
      %768 = vmatprep.mubr.f32.mxu0 0.0
      %769 = vmatmul.mubr.f32.gmra.mxu0 %v315
      %v770 = vpop.f32.mrf.mxu0
      %v771 = vadd.f32 0.0, %v770
      %v772 = vpop.f32.mrf.mxu0
      %773 = vmatprep.mubr.f32.mxu0 0.0
      %774 = vmatmul.mubr.f32.gmra.mxu0 %v318
      %v775 = vpop.f32.mrf.mxu0
      %v776 = vadd.f32 0.0, %v775
      %v777 = vpop.f32.mrf.mxu0
      %778 = vmatprep.mubr.f32.mxu0 0.0
      %779 = vmatmul.mubr.f32.gmra.mxu0 %v321
      %v780 = vpop.f32.mrf.mxu0
      %v781 = vadd.f32 0.0, %v780
      %v782 = vpop.f32.mrf.mxu0
      %783 = vmatprep.mubr.f32.mxu0 0.0
      %784 = vmatmul.mubr.f32.gmra.mxu0 %v324
      %v785 = vpop.f32.mrf.mxu0
      %v786 = vadd.f32 0.0, %v785
      %v787 = vpop.f32.mrf.mxu0
      %788 = vmatprep.mubr.f32.mxu0 0.0
      %789 = vmatmul.mubr.f32.gmra.mxu0 %v327
      %v790 = vpop.f32.mrf.mxu0
      %v791 = vadd.f32 0.0, %v790
      %v792 = vpop.f32.mrf.mxu0
      %793 = vmatprep.mubr.f32.mxu0 0.0
      %794 = vmatmul.mubr.f32.gmra.mxu0 %v330
      %v795 = vpop.f32.mrf.mxu0
      %v796 = vadd.f32 0.0, %v795
      %v797 = vpop.f32.mrf.mxu0
      %798 = vmatprep.mubr.f32.mxu0 0.0
      %799 = vmatmul.mubr.f32.gmra.mxu0 %v333
      %v800 = vpop.f32.mrf.mxu0
      %v801 = vadd.f32 0.0, %v800
      %v802 = vpop.f32.mrf.mxu0
      %803 = vmatprep.mubr.f32.mxu0 0.0
      %804 = vmatmul.mubr.f32.gmra.mxu0 %v336
      %v805 = vpop.f32.mrf.mxu0
      %v806 = vadd.f32 0.0, %v805
      %v807 = vpop.f32.mrf.mxu0
      %808 = vmatprep.mubr.f32.mxu0 0.0
      %809 = vmatmul.mubr.f32.gmra.mxu0 %v339
      %v810 = vpop.f32.mrf.mxu0
      %v811 = vadd.f32 0.0, %v810
      %v812 = vpop.f32.mrf.mxu0
      %813 = vmatprep.mubr.f32.mxu0 0.0
      %814 = vmatmul.mubr.f32.gmra.mxu0 %v342
      %v815 = vpop.f32.mrf.mxu0
      %v816 = vadd.f32 0.0, %v815
      %v817 = vpop.f32.mrf.mxu0
      %818 = vmatprep.mubr.f32.mxu0 0.0
      %819 = vmatmul.mubr.f32.gmra.mxu0 %v345
      %v820 = vpop.f32.mrf.mxu0
      %v821 = vadd.f32 0.0, %v820
      %v822 = vpop.f32.mrf.mxu0
      %823 = vmatprep.mubr.f32.mxu0 0.0
      %824 = vmatmul.mubr.f32.gmra.mxu0 %v348
      %v825 = vpop.f32.mrf.mxu0
      %v826 = vadd.f32 0.0, %v825
      %v827 = vpop.f32.mrf.mxu0
      %828 = vmatprep.mubr.f32.mxu0 0.0
      %829 = vmatmul.mubr.f32.gmra.mxu0 %v351
      %v830 = vpop.f32.mrf.mxu0
      %v831 = vadd.f32 0.0, %v830
      %v832 = vpop.f32.mrf.mxu0
      %833 = vmatprep.mubr.f32.mxu0 0.0
      %834 = vmatmul.mubr.f32.gmra.mxu0 %v354
      %v835 = vpop.f32.mrf.mxu0
      %v836 = vadd.f32 0.0, %v835
      %v837 = vpop.f32.mrf.mxu0
      %838 = vmatprep.mubr.f32.mxu0 0.0
      %839 = vmatmul.mubr.f32.gmra.mxu0 %v357
      %v840 = vpop.f32.mrf.mxu0
      %v841 = vadd.f32 0.0, %v840
      %v842 = vpop.f32.mrf.mxu0
      %843 = vmatprep.mubr.f32.mxu0 0.0
      %844 = vmatmul.mubr.f32.gmra.mxu0 %v360
      %v845 = vpop.f32.mrf.mxu0
      %v846 = vadd.f32 0.0, %v845
      %v847 = vpop.f32.mrf.mxu0
      %848 = vmatprep.mubr.f32.mxu0 0.0
      %849 = vmatmul.mubr.f32.gmra.mxu0 %v363
      %v850 = vpop.f32.mrf.mxu0
      %v851 = vadd.f32 0.0, %v850
      %v852 = vpop.f32.mrf.mxu0
      %853 = vmatprep.mubr.f32.mxu0 0.0
      %854 = vmatmul.mubr.f32.gmra.mxu0 %v366
      %v855 = vpop.f32.mrf.mxu0
      %v856 = vadd.f32 0.0, %v855
      %v857 = vpop.f32.mrf.mxu0
      %858 = vmatprep.mubr.f32.mxu0 0.0
      %859 = vmatmul.mubr.f32.gmra.mxu0 %v369
      %v860 = vpop.f32.mrf.mxu0
      %v861 = vadd.f32 0.0, %v860
      %v862 = vpop.f32.mrf.mxu0
      %863 = vmatprep.mubr.f32.mxu0 0.0
      %864 = vmatmul.mubr.f32.gmra.mxu0 %v372
      %v865 = vpop.f32.mrf.mxu0
      %v866 = vadd.f32 0.0, %v865
      %v867 = vpop.f32.mrf.mxu0
      %868 = vmatprep.mubr.f32.mxu0 0.0
      %869 = vmatmul.mubr.f32.gmra.mxu0 %v375
      %v870 = vpop.f32.mrf.mxu0
      %v871 = vadd.f32 0.0, %v870
      %v872 = vpop.f32.mrf.mxu0
      %873 = vmatprep.mubr.f32.mxu0 0.0
      %874 = vmatmul.mubr.f32.gmra.mxu0 %v378
      %v875 = vpop.f32.mrf.mxu0
      %v876 = vadd.f32 0.0, %v875
      %v877 = vpop.f32.mrf.mxu0
      %878 = vmatprep.mubr.f32.mxu0 0.0
      %879 = vmatmul.mubr.f32.gmra.mxu0 %v381
      %v880 = vpop.f32.mrf.mxu0
      %v881 = vadd.f32 0.0, %v880
      %v882 = vpop.f32.mrf.mxu0
      %883 = vmatprep.mubr.f32.mxu0 0.0
      %884 = vmatmul.mubr.f32.gmra.mxu0 %v384
      %v885 = vpop.f32.mrf.mxu0
      %v886 = vadd.f32 0.0, %v885
      %v887 = vpop.f32.mrf.mxu0
      %888 = vmatprep.mubr.f32.mxu0 0.0
      %889 = vmatmul.mubr.f32.gmra.mxu0 %v387
      %v890 = vpop.f32.mrf.mxu0
      %v891 = vadd.f32 0.0, %v890
      %v892 = vpop.f32.mrf.mxu0
      %893 = vmatprep.mubr.f32.mxu0 0.0
      %894 = vmatmul.mubr.f32.gmra.mxu0 %v390
      %v895 = vpop.f32.mrf.mxu0
      %v896 = vadd.f32 0.0, %v895
      %v897 = vpop.f32.mrf.mxu0
      %898 = vmatprep.mubr.f32.mxu0 0.0
      %899 = vmatmul.mubr.f32.gmra.mxu0 %v393
      %v900 = vpop.f32.mrf.mxu0
      %v901 = vadd.f32 0.0, %v900
      %v902 = vpop.f32.mrf.mxu0
      %903 = vmatprep.mubr.f32.mxu0 0.0
      %904 = vmatmul.mubr.f32.gmra.mxu0 %v396
      %v905 = vpop.f32.mrf.mxu0
      %v906 = vadd.f32 0.0, %v905
      %v907 = vpop.f32.mrf.mxu0
      %908 = vmatprep.mubr.f32.mxu0 0.0
      %909 = vmatmul.mubr.f32.gmra.mxu0 %v399
      %v910 = vpop.f32.mrf.mxu0
      %v911 = vadd.f32 0.0, %v910
      %v912 = vpop.f32.mrf.mxu0
      %913 = vmatprep.mubr.f32.mxu0 0.0
      %914 = vmatmul.mubr.f32.gmra.mxu0 %v402
      %v915 = vpop.f32.mrf.mxu0
      %v916 = vadd.f32 0.0, %v915
      %v917 = vpop.f32.mrf.mxu0
      %918 = vmatprep.mubr.f32.mxu0 0.0
      %919 = vmatmul.mubr.f32.gmra.mxu0 %v405
      %v920 = vpop.f32.mrf.mxu0
      %v921 = vadd.f32 0.0, %v920
      %v922 = vpop.f32.mrf.mxu0
      %923 = vmatprep.mubr.f32.mxu0 0.0
      %924 = vmatmul.mubr.f32.gmra.mxu0 %v408
      %v925 = vpop.f32.mrf.mxu0
      %v926 = vadd.f32 0.0, %v925
      %v927 = vpop.f32.mrf.mxu0
      %928 = vmatprep.mubr.f32.mxu0 0.0
      %929 = vmatmul.mubr.f32.gmra.mxu0 %v411
      %v930 = vpop.f32.mrf.mxu0
      %v931 = vadd.f32 0.0, %v930
      %v932 = vpop.f32.mrf.mxu0
      %933 = vmatprep.mubr.f32.mxu0 0.0
      %934 = vmatmul.mubr.f32.gmra.mxu0 %v414
      %v935 = vpop.f32.mrf.mxu0
      %v936 = vadd.f32 0.0, %v935
      %v937 = vpop.f32.mrf.mxu0
      %938 = vmatprep.mubr.f32.mxu0 0.0
      %939 = vmatmul.mubr.f32.gmra.mxu0 %v417
      %v940 = vpop.f32.mrf.mxu0
      %v941 = vadd.f32 0.0, %v940
      %v942 = vpop.f32.mrf.mxu0
      %943 = vmatprep.mubr.f32.mxu0 0.0
      %944 = vmatmul.mubr.f32.gmra.mxu0 %v420
      %v945 = vpop.f32.mrf.mxu0
      %v946 = vadd.f32 0.0, %v945
      %v947 = vpop.f32.mrf.mxu0
      %948 = vmatprep.mubr.f32.mxu0 0.0
      %949 = vmatmul.mubr.f32.gmra.mxu0 %v423
      %v950 = vpop.f32.mrf.mxu0
      %v951 = vadd.f32 0.0, %v950
      %v952 = vpop.f32.mrf.mxu0
      %953 = vmatprep.mubr.f32.mxu0 0.0
      %954 = vmatmul.mubr.f32.gmra.mxu0 %v426
      %v955 = vpop.f32.mrf.mxu0
      %v956 = vadd.f32 0.0, %v955
      %v957 = vpop.f32.mrf.mxu0
      %958 = vmatprep.mubr.f32.mxu0 0.0
      %959 = vmatmul.mubr.f32.gmra.mxu0 %v429
      %v960 = vpop.f32.mrf.mxu0
      %v961 = vadd.f32 0.0, %v960
      %v962 = vpop.f32.mrf.mxu0
      %963 = vmatprep.mubr.f32.mxu0 0.0
      %964 = vmatmul.mubr.f32.gmra.mxu0 %v432
      %v965 = vpop.f32.mrf.mxu0
      %v966 = vadd.f32 0.0, %v965
      %v967 = vpop.f32.mrf.mxu0
      %968 = vmatprep.mubr.f32.mxu0 0.0
      %969 = vmatmul.mubr.f32.gmra.mxu0 %v435
      %v970 = vpop.f32.mrf.mxu0
      %v971 = vadd.f32 0.0, %v970
      %v972 = vpop.f32.mrf.mxu0
      %973 = vmatprep.mubr.f32.mxu0 0.0
      %974 = vmatmul.mubr.f32.gmra.mxu0 %v438
      %v975 = vpop.f32.mrf.mxu0
      %v976 = vadd.f32 0.0, %v975
      %v977 = vpop.f32.mrf.mxu0
      %978 = vmatprep.mubr.f32.mxu0 0.0
      %979 = vmatmul.mubr.f32.gmra.mxu0 %v441
      %v980 = vpop.f32.mrf.mxu0
      %v981 = vadd.f32 0.0, %v980
      %v982 = vpop.f32.mrf.mxu0
      %983 = vmatprep.mubr.f32.mxu0 0.0
      %984 = vmatmul.mubr.f32.gmra.mxu0 %v444
      %v985 = vpop.f32.mrf.mxu0
      %v986 = vadd.f32 0.0, %v985
      %v987 = vpop.f32.mrf.mxu0
      %988 = vmatprep.mubr.f32.mxu0 0.0
      %989 = vmatmul.mubr.f32.gmra.mxu0 %v447
      %v990 = vpop.f32.mrf.mxu0
      %v991 = vadd.f32 0.0, %v990
      %v992 = vpop.f32.mrf.mxu0
      %993 = vmatprep.mubr.f32.mxu0 0.0
      %994 = vmatmul.mubr.f32.gmra.mxu0 %v450
      %v995 = vpop.f32.mrf.mxu0
      %v996 = vadd.f32 0.0, %v995
      %v997 = vpop.f32.mrf.mxu0
      %998 = vmatprep.mubr.f32.mxu0 0.0
      %999 = vmatmul.mubr.f32.gmra.mxu0 %v453
      %v1000 = vpop.f32.mrf.mxu0
      %v1001 = vadd.f32 0.0, %v1000
      %v1002 = vpop.f32.mrf.mxu0
      %1003 = vmatprep.mubr.f32.mxu0 0.0
      %1004 = vmatmul.mubr.f32.gmra.mxu0 %v456
      %v1005 = vpop.f32.mrf.mxu0
      %v1006 = vadd.f32 0.0, %v1005
      %v1007 = vpop.f32.mrf.mxu0
      %1008 = vmatprep.mubr.f32.mxu0 0.0
      %1009 = vmatmul.mubr.f32.gmra.mxu0 %v459
      %v1010 = vpop.f32.mrf.mxu0
      %v1011 = vadd.f32 0.0, %v1010
      %v1012 = vpop.f32.mrf.mxu0
      %1013 = vmatprep.mubr.f32.mxu0 0.0
      %1014 = vmatmul.mubr.f32.gmra.mxu0 %v462
      %v1015 = vpop.f32.mrf.mxu0
      %v1016 = vadd.f32 0.0, %v1015
      %v1017 = vpop.f32.mrf.mxu0
      %1018 = vmatprep.mubr.f32.mxu0 0.0
      %1019 = vmatmul.mubr.f32.gmra.mxu0 %v465
      %v1020 = vpop.f32.mrf.mxu0
      %v1021 = vadd.f32 0.0, %v1020
      %v1022 = vpop.f32.mrf.mxu0
      %1023 = vmatprep.mubr.f32.mxu0 0.0
      %1024 = vmatmul.mubr.f32.gmra.mxu0 %v468
      %v1025 = vpop.f32.mrf.mxu0
      %v1026 = vadd.f32 0.0, %v1025
      %v1027 = vpop.f32.mrf.mxu0
      %1028 = vmatprep.mubr.f32.mxu0 0.0
      %1029 = vmatmul.mubr.f32.gmra.mxu0 %v471
      %v1030 = vpop.f32.mrf.mxu0
      %v1031 = vadd.f32 0.0, %v1030
      %v1032 = vpop.f32.mrf.mxu0
      %1033 = vmatprep.mubr.f32.mxu0 0.0
      %1034 = vmatmul.mubr.f32.gmra.mxu0 %v474
      %v1035 = vpop.f32.mrf.mxu0
      %v1036 = vadd.f32 0.0, %v1035
      %v1037 = vpop.f32.mrf.mxu0
      %1038 = vmatprep.mubr.f32.mxu0 0.0
      %1039 = vmatmul.mubr.f32.gmra.mxu0 %v477
      %v1040 = vpop.f32.mrf.mxu0
      %v1041 = vadd.f32 0.0, %v1040
      %v1042 = vpop.f32.mrf.mxu0
      %1043 = vmatprep.mubr.f32.mxu0 0.0
      %1044 = vmatmul.mubr.f32.gmra.mxu0 %v480
      %v1045 = vpop.f32.mrf.mxu0
      %v1046 = vadd.f32 0.0, %v1045
      %v1047 = vpop.f32.mrf.mxu0
      %1048 = vmatprep.mubr.f32.mxu0 0.0
      %1049 = vmatmul.mubr.f32.gmra.mxu0 %v483
      %v1050 = vpop.f32.mrf.mxu0
      %v1051 = vadd.f32 0.0, %v1050
      %v1052 = vpop.f32.mrf.mxu0
      %1053 = vmatprep.mubr.f32.mxu0 0.0
      %1054 = vmatmul.mubr.f32.gmra.mxu0 %v486
      %v1055 = vpop.f32.mrf.mxu0
      %v1056 = vadd.f32 0.0, %v1055
      %v1057 = vpop.f32.mrf.mxu0
      %1058 = vmatprep.mubr.f32.mxu0 0.0
      %1059 = vmatmul.mubr.f32.gmra.mxu0 %v489
      %v1060 = vpop.f32.mrf.mxu0
      %v1061 = vadd.f32 0.0, %v1060
      %v1062 = vpop.f32.mrf.mxu0
      %1063 = vmatprep.mubr.f32.mxu0 0.0
      %1064 = vmatmul.mubr.f32.gmra.mxu0 %v492
      %v1065 = vpop.f32.mrf.mxu0
      %v1066 = vadd.f32 0.0, %v1065
      %v1067 = vpop.f32.mrf.mxu0
      %1068 = vmatprep.mubr.f32.mxu0 0.0
      %1069 = vmatmul.mubr.f32.gmra.mxu0 %v495
      %v1070 = vpop.f32.mrf.mxu0
      %v1071 = vadd.f32 0.0, %v1070
      %v1072 = vpop.f32.mrf.mxu0
      %1073 = vmatprep.mubr.f32.mxu0 0.0
      %1074 = vmatmul.mubr.f32.gmra.mxu0 %v498
      %v1075 = vpop.f32.mrf.mxu0
      %v1076 = vadd.f32 0.0, %v1075
      %v1077 = vpop.f32.mrf.mxu0
      %1078 = vmatprep.mubr.f32.mxu0 0.0
      %1079 = vmatmul.mubr.f32.gmra.mxu0 %v501
      %v1080 = vpop.f32.mrf.mxu0
      %v1081 = vadd.f32 0.0, %v1080
      %v1082 = vpop.f32.mrf.mxu0
      %1083 = vmatprep.mubr.f32.mxu0 0.0
      %1084 = vmatmul.mubr.f32.gmra.mxu0 %v504
      %v1085 = vpop.f32.mrf.mxu0
      %v1086 = vadd.f32 0.0, %v1085
      %v1087 = vpop.f32.mrf.mxu0
      %1088 = vmatprep.mubr.f32.mxu0 0.0
      %1089 = vmatmul.mubr.f32.gmra.mxu0 %v507
      %v1090 = vpop.f32.mrf.mxu0
      %v1091 = vadd.f32 0.0, %v1090
      %v1092 = vpop.f32.mrf.mxu0
      %1093 = vmatprep.mubr.f32.mxu0 0.0
      %1094 = vmatmul.mubr.f32.gmra.mxu0 %v510
      %v1095 = vpop.f32.mrf.mxu0
      %v1096 = vadd.f32 0.0, %v1095
      %v1097 = vpop.f32.mrf.mxu0
      %1098 = vmatprep.mubr.f32.mxu0 0.0
      %1099 = vmatmul.mubr.f32.gmra.mxu0 %v513
      %v1100 = vpop.f32.mrf.mxu0
      %v1101 = vadd.f32 0.0, %v1100
      %v1102 = vpop.f32.mrf.mxu0
      %1103 = vmatprep.mubr.f32.mxu0 0.0
      %1104 = vmatmul.mubr.f32.gmra.mxu0 %v516
      %v1105 = vpop.f32.mrf.mxu0
      %v1106 = vadd.f32 0.0, %v1105
      %v1107 = vpop.f32.mrf.mxu0
      %1108 = vmatprep.mubr.f32.mxu0 0.0
      %1109 = vmatmul.mubr.f32.gmra.mxu0 %v519
      %v1110 = vpop.f32.mrf.mxu0
      %v1111 = vadd.f32 0.0, %v1110
      %v1112 = vpop.f32.mrf.mxu0
      %1113 = vmatprep.mubr.f32.mxu0 0.0
      %1114 = vmatmul.mubr.f32.gmra.mxu0 %v522
      %v1115 = vpop.f32.mrf.mxu0
      %v1116 = vadd.f32 0.0, %v1115
      %v1117 = vpop.f32.mrf.mxu0
      %1118 = vmatprep.mubr.f32.mxu0 0.0
      %1119 = vmatmul.mubr.f32.gmra.mxu0 %v525
      %v1120 = vpop.f32.mrf.mxu0
      %v1121 = vadd.f32 0.0, %v1120
      %v1122 = vpop.f32.mrf.mxu0
      %1123 = vmatprep.mubr.f32.mxu0 0.0
      %1124 = vmatmul.mubr.f32.gmra.mxu0 %v528
      %v1125 = vpop.f32.mrf.mxu0
      %v1126 = vadd.f32 0.0, %v1125
      %v1127 = vpop.f32.mrf.mxu0
      %1128 = vmatprep.mubr.f32.mxu0 0.0
      %1129 = vmatmul.mubr.f32.gmra.mxu0 %v531
      %v1130 = vpop.f32.mrf.mxu0
      %v1131 = vadd.f32 0.0, %v1130
      %v1132 = vpop.f32.mrf.mxu0
      %1133 = vmatprep.mubr.f32.mxu0 0.0
      %1134 = vmatmul.mubr.f32.gmra.mxu0 %v534
      %v1135 = vpop.f32.mrf.mxu0
      %v1136 = vadd.f32 0.0, %v1135
      %v1137 = vpop.f32.mrf.mxu0
      %1138 = vmatprep.mubr.f32.mxu0 0.0
      %1139 = vmatmul.mubr.f32.gmra.mxu0 %v537
      %v1140 = vpop.f32.mrf.mxu0
      %v1141 = vadd.f32 0.0, %v1140
      %v1142 = vpop.f32.mrf.mxu0
      %1143 = vmatprep.mubr.f32.mxu0 0.0
      %1144 = vmatmul.mubr.f32.gmra.mxu0 %v540
      %v1145 = vpop.f32.mrf.mxu0
      %v1146 = vadd.f32 0.0, %v1145
      %v1147 = vpop.f32.mrf.mxu0
      %1148 = vmatprep.mubr.f32.mxu0 0.0
      %1149 = vmatmul.mubr.f32.gmra.mxu0 %v543
      %v1150 = vpop.f32.mrf.mxu0
      %v1151 = vadd.f32 0.0, %v1150
      %v1152 = vpop.f32.mrf.mxu0
      %1153 = vmatprep.mubr.f32.mxu0 0.0
      %1154 = vmatmul.mubr.f32.gmra.mxu0 %v546
      %v1155 = vpop.f32.mrf.mxu0
      %v1156 = vadd.f32 0.0, %v1155
      %v1157 = vpop.f32.mrf.mxu0
      %1158 = vmatprep.mubr.f32.mxu0 0.0
      %1159 = vmatmul.mubr.f32.gmra.mxu0 %v549
      %v1160 = vpop.f32.mrf.mxu0
      %v1161 = vadd.f32 0.0, %v1160
      %v1162 = vpop.f32.mrf.mxu0
      %1163 = vmatprep.mubr.f32.mxu0 0.0
      %1164 = vmatmul.mubr.f32.gmra.mxu0 %v552
      %v1165 = vpop.f32.mrf.mxu0
      %v1166 = vadd.f32 0.0, %v1165
      %v1167 = vpop.f32.mrf.mxu0
      %1168 = vmatprep.mubr.f32.mxu0 0.0
      %1169 = vmatmul.mubr.f32.gmra.mxu0 %v555
      %v1170 = vpop.f32.mrf.mxu0
      %v1171 = vadd.f32 0.0, %v1170
      %v1172 = vpop.f32.mrf.mxu0
      %1173 = vmatprep.mubr.f32.mxu0 0.0
      %1174 = vmatmul.mubr.f32.gmra.mxu0 %v558
      %v1175 = vpop.f32.mrf.mxu0
      %v1176 = vadd.f32 0.0, %v1175
      %v1177 = vpop.f32.mrf.mxu0
      %1178 = vmatprep.mubr.f32.mxu0 0.0
      %1179 = vmatmul.mubr.f32.gmra.mxu0 %v561
      %v1180 = vpop.f32.mrf.mxu0
      %v1181 = vadd.f32 0.0, %v1180
      %v1182 = vpop.f32.mrf.mxu0
      %1183 = vmatprep.mubr.f32.mxu0 0.0
      %1184 = vmatmul.mubr.f32.gmra.mxu0 %v564
      %v1185 = vpop.f32.mrf.mxu0
      %v1186 = vadd.f32 0.0, %v1185
      %v1187 = vpop.f32.mrf.mxu0
      %1188 = vmatprep.mubr.f32.mxu0 0.0
      %1189 = vmatmul.mubr.f32.gmra.mxu0 %v567
      %v1190 = vpop.f32.mrf.mxu0
      %v1191 = vadd.f32 0.0, %v1190
      %v1192 = vpop.f32.mrf.mxu0
      %1193 = vmatprep.mubr.f32.mxu0 0.0
      %1194 = vmatmul.mubr.f32.gmra.mxu0 %v570
      %v1195 = vpop.f32.mrf.mxu0
      %v1196 = vadd.f32 0.0, %v1195
      %v1197 = vpop.f32.mrf.mxu0
      %1198 = vmatprep.mubr.f32.mxu0 0.0
      %1199 = vmatmul.mubr.f32.gmra.mxu0 %v573
      %v1200 = vpop.f32.mrf.mxu0
      %v1201 = vadd.f32 0.0, %v1200
      %v1202 = vpop.f32.mrf.mxu0
      %1203 = vmatprep.mubr.f32.mxu0 0.0
      %1204 = vmatmul.mubr.f32.gmra.mxu0 %v576
      %v1205 = vpop.f32.mrf.mxu0
      %v1206 = vadd.f32 0.0, %v1205
      %v1207 = vpop.f32.mrf.mxu0
      %1208 = vmatprep.mubr.f32.mxu0 0.0
      %1209 = vmatmul.mubr.f32.gmra.mxu0 %v579
      %v1210 = vpop.f32.mrf.mxu0
      %v1211 = vadd.f32 0.0, %v1210
      %v1212 = vpop.f32.mrf.mxu0
      %1213 = vmatprep.mubr.f32.mxu0 0.0
      %1214 = vmatmul.mubr.f32.gmra.mxu0 %v582
      %v1215 = vpop.f32.mrf.mxu0
      %v1216 = vadd.f32 0.0, %v1215
      %v1217 = vpop.f32.mrf.mxu0
      %1218 = vmatprep.mubr.f32.mxu0 0.0
      %1219 = vmatmul.mubr.f32.gmra.mxu0 %v585
      %v1220 = vpop.f32.mrf.mxu0
      %v1221 = vadd.f32 0.0, %v1220
      %v1222 = vpop.f32.mrf.mxu0
      %1223 = vmatprep.mubr.f32.mxu0 0.0
      %1224 = vmatmul.mubr.f32.gmra.mxu0 %v588
      %v1225 = vpop.f32.mrf.mxu0
      %v1226 = vadd.f32 0.0, %v1225
      %v1227 = vpop.f32.mrf.mxu0
      %1228 = vmatprep.mubr.f32.mxu0 0.0
      %1229 = vmatmul.mubr.f32.gmra.mxu0 %v591
      %v1230 = vpop.f32.mrf.mxu0
      %v1231 = vadd.f32 0.0, %v1230
      %v1232 = vpop.f32.mrf.mxu0
      %1233 = vmatprep.mubr.f32.mxu0 0.0
      %1234 = vmatmul.mubr.f32.gmra.mxu0 %v594
      %v1235 = vpop.f32.mrf.mxu0
      %v1236 = vadd.f32 0.0, %v1235
      %v1237 = vpop.f32.mrf.mxu0
      %1238 = vmatprep.mubr.f32.mxu0 0.0
      %1239 = vmatmul.mubr.f32.gmra.mxu0 %v597
      %v1240 = vpop.f32.mrf.mxu0
      %v1241 = vadd.f32 0.0, %v1240
      %v1242 = vpop.f32.mrf.mxu0
      %1243 = vmatprep.mubr.f32.mxu0 0.0
      %1244 = vmatmul.mubr.f32.gmra.mxu0 %v600
      %v1245 = vpop.f32.mrf.mxu0
      %v1246 = vadd.f32 0.0, %v1245
      %v1247 = vpop.f32.mrf.mxu0
      %1248 = vmatprep.mubr.f32.mxu0 0.0
      %1249 = vmatmul.mubr.f32.gmra.mxu0 %v603
      %v1250 = vpop.f32.mrf.mxu0
      %v1251 = vadd.f32 0.0, %v1250
      %v1252 = vpop.f32.mrf.mxu0
      %1253 = vmatprep.mubr.f32.mxu0 0.0
      %1254 = vmatmul.mubr.f32.gmra.mxu0 %v606
      %v1255 = vpop.f32.mrf.mxu0
      %v1256 = vadd.f32 0.0, %v1255
      %v1257 = vpop.f32.mrf.mxu0
      %1258 = vmatprep.mubr.f32.mxu0 0.0
      %1259 = vmatmul.mubr.f32.gmra.mxu0 %v609
      %v1260 = vpop.f32.mrf.mxu0
      %v1261 = vadd.f32 0.0, %v1260
      %v1262 = vpop.f32.mrf.mxu0
      %1263 = vmatprep.mubr.f32.mxu0 0.0
      %1264 = vmatmul.mubr.f32.gmra.mxu0 %v612
      %v1265 = vpop.f32.mrf.mxu0
      %v1266 = vadd.f32 0.0, %v1265
      %v1267 = vpop.f32.mrf.mxu0
      %1268 = vmatprep.mubr.f32.mxu0 0.0
      %1269 = vmatmul.mubr.f32.gmra.mxu0 %v615
      %v1270 = vpop.f32.mrf.mxu0
      %v1271 = vadd.f32 0.0, %v1270
      %v1272 = vpop.f32.mrf.mxu0
      %1273 = vmatprep.mubr.f32.mxu0 0.0
      %1274 = vmatmul.mubr.f32.gmra.mxu0 %v618
      %v1275 = vpop.f32.mrf.mxu0
      %v1276 = vadd.f32 0.0, %v1275
      %v1277 = vpop.f32.mrf.mxu0
      %1278 = vmatprep.mubr.f32.mxu0 0.0
      %1279 = vmatmul.mubr.f32.gmra.mxu0 %v621
      %v1280 = vpop.f32.mrf.mxu0
      %v1281 = vadd.f32 0.0, %v1280
      %v1282 = vpop.f32.mrf.mxu0
      %1283 = vmatprep.mubr.f32.mxu0 0.0
      %1284 = vmatmul.mubr.f32.gmra.mxu0 %v624
      %v1285 = vpop.f32.mrf.mxu0
      %v1286 = vadd.f32 0.0, %v1285
      %v1287 = vpop.f32.mrf.mxu0
      %1288 = vmatprep.mubr.f32.mxu0 0.0
      %1289 = vmatmul.mubr.f32.gmra.mxu0 %v627
      %v1290 = vpop.f32.mrf.mxu0
      %v1291 = vadd.f32 0.0, %v1290
      %v1292 = vpop.f32.mrf.mxu0
      %1293 = vmatprep.mubr.f32.mxu0 0.0
      %1294 = vmatmul.mubr.f32.gmra.mxu0 %v630
      %v1295 = vpop.f32.mrf.mxu0
      %v1296 = vadd.f32 0.0, %v1295
      %v1297 = vpop.f32.mrf.mxu0
      %1298 = vmatprep.mubr.f32.mxu0 0.0
      %1299 = vmatmul.mubr.f32.gmra.mxu0 %v633
      %v1300 = vpop.f32.mrf.mxu0
      %v1301 = vadd.f32 0.0, %v1300
      %v1302 = vpop.f32.mrf.mxu0
      %1303 = vmatprep.mubr.f32.mxu0 0.0
      %1304 = vmatmul.mubr.f32.gmra.mxu0 %v636
      %v1305 = vpop.f32.mrf.mxu0
      %v1306 = vadd.f32 0.0, %v1305
      %v1307 = vpop.f32.mrf.mxu0
      %1308 = vmatprep.mubr.f32.mxu0 0.0
      %1309 = vmatmul.mubr.f32.gmra.mxu0 %v639
      %v1310 = vpop.f32.mrf.mxu0
      %v1311 = vadd.f32 0.0, %v1310
      %v1312 = vpop.f32.mrf.mxu0
      %1313 = vmatprep.mubr.f32.mxu0 0.0
      %1314 = vmatmul.mubr.f32.gmra.mxu0 %v642
      %v1315 = vpop.f32.mrf.mxu0
      %v1316 = vadd.f32 0.0, %v1315
      %v1317 = vpop.f32.mrf.mxu0
      %1318 = vmatprep.mubr.f32.mxu0 0.0
      %1319 = vmatmul.mubr.f32.gmra.mxu0 %v645
      %v1320 = vpop.f32.mrf.mxu0
      %v1321 = vadd.f32 0.0, %v1320
      %v1322 = vpop.f32.mrf.mxu0
      %1323 = vmatprep.mubr.f32.mxu0 0.0
      %1324 = vmatmul.mubr.f32.gmra.mxu0 %v648
      %v1325 = vpop.f32.mrf.mxu0
      %v1326 = vadd.f32 0.0, %v1325
      %v1327 = vpop.f32.mrf.mxu0
      %1328 = vmatprep.mubr.f32.mxu0 0.0
      %1329 = vmatmul.mubr.f32.gmra.mxu0 %v651
      %v1330 = vpop.f32.mrf.mxu0
      %v1331 = vadd.f32 0.0, %v1330
      %v1332 = vpop.f32.mrf.mxu0
      %1333 = vmatprep.mubr.f32.mxu0 0.0
      %1334 = vmatmul.mubr.f32.gmra.mxu0 %v654
      %v1335 = vpop.f32.mrf.mxu0
      %v1336 = vadd.f32 0.0, %v1335
      %v1337 = vpop.f32.mrf.mxu0
      %1338 = vmatprep.mubr.f32.mxu0 0.0
      %1339 = vmatmul.mubr.f32.gmra.mxu0 %v657
      %v1340 = vpop.f32.mrf.mxu0
      %v1341 = vadd.f32 0.0, %v1340
      %v1342 = vpop.f32.mrf.mxu0
      %1343 = vmatprep.mubr.f32.mxu0 0.0
      %1344 = vmatmul.mubr.f32.gmra.mxu0 %v660
      %v1345 = vpop.f32.mrf.mxu0
      %v1346 = vadd.f32 0.0, %v1345
      %v1347 = vpop.f32.mrf.mxu0
      %1348 = vmatprep.mubr.f32.mxu0 0.0
      %1349 = vmatmul.mubr.f32.gmra.mxu0 %v663
      %v1350 = vpop.f32.mrf.mxu0
      %v1351 = vadd.f32 0.0, %v1350
      %v1352 = vpop.f32.mrf.mxu0
      %1353 = vmatprep.mubr.f32.mxu0 0.0
      %1354 = vmatmul.mubr.f32.gmra.mxu0 %v666
      %v1355 = vpop.f32.mrf.mxu0
      %v1356 = vadd.f32 0.0, %v1355
      %v1357 = vpop.f32.mrf.mxu0
      %1358 = vmatprep.mubr.f32.mxu0 0.0
      %1359 = vmatmul.mubr.f32.gmra.mxu0 %v669
      %v1360 = vpop.f32.mrf.mxu0
      %v1361 = vadd.f32 0.0, %v1360
      %v1362 = vpop.f32.mrf.mxu0
      %1363 = vmatprep.mubr.f32.mxu0 0.0
      %1364 = vmatmul.mubr.f32.gmra.mxu0 %v672
      %v1365 = vpop.f32.mrf.mxu0
      %v1366 = vadd.f32 0.0, %v1365
      %v1367 = vpop.f32.mrf.mxu0
      %1368 = vmatprep.mubr.f32.mxu0 0.0
      %1369 = vmatmul.mubr.f32.gmra.mxu0 %v675
      %v1370 = vpop.f32.mrf.mxu0
      %v1371 = vadd.f32 0.0, %v1370
      %v1372 = vpop.f32.mrf.mxu0
      %1373 = vmatprep.mubr.f32.mxu0 0.0
      %1374 = vmatmul.mubr.f32.gmra.mxu0 %v678
      %v1375 = vpop.f32.mrf.mxu0
      %v1376 = vadd.f32 0.0, %v1375
      %v1377 = vpop.f32.mrf.mxu0
      %1378 = vmatprep.mubr.f32.mxu0 0.0
      %1379 = vmatmul.mubr.f32.gmra.mxu0 %v681
      %v1380 = vpop.f32.mrf.mxu0
      %v1381 = vadd.f32 0.0, %v1380
      %v1382 = vpop.f32.mrf.mxu0
      %1383 = vmatprep.mubr.f32.mxu0 0.0
      %1384 = vmatmul.mubr.f32.gmra.mxu0 %v684
      %v1385 = vpop.f32.mrf.mxu0
      %v1386 = vadd.f32 0.0, %v1385
      %v1387 = vpop.f32.mrf.mxu0
      %1388 = vmatprep.mubr.f32.mxu0 0.0
      %1389 = vmatmul.mubr.f32.gmra.mxu0 %v687
      %v1390 = vpop.f32.mrf.mxu0
      %v1391 = vadd.f32 0.0, %v1390
      %v1392 = vpop.f32.mrf.mxu0
      %1393 = vdwg.mxu0
      %v1394 = vmax.f32 %v756, 0.0
      %v1395 = vmax.f32 %v761, 0.0
      %v1396 = vmax.f32 %v766, 0.0
      %v1397 = vmax.f32 %v771, 0.0
      %v1398 = vmax.f32 %v776, 0.0
      %v1399 = vmax.f32 %v781, 0.0
      %v1400 = vmax.f32 %v786, 0.0
      %v1401 = vmax.f32 %v791, 0.0
      %v1402 = vmax.f32 %v796, 0.0
      %v1403 = vmax.f32 %v801, 0.0
      %v1404 = vmax.f32 %v806, 0.0
      %v1405 = vmax.f32 %v811, 0.0
      %v1406 = vmax.f32 %v816, 0.0
      %v1407 = vmax.f32 %v821, 0.0
      %v1408 = vmax.f32 %v826, 0.0
      %v1409 = vmax.f32 %v831, 0.0
      %v1410 = vmax.f32 %v836, 0.0
      %v1411 = vmax.f32 %v841, 0.0
      %v1412 = vmax.f32 %v846, 0.0
      %v1413 = vmax.f32 %v851, 0.0
      %v1414 = vmax.f32 %v856, 0.0
      %v1415 = vmax.f32 %v861, 0.0
      %v1416 = vmax.f32 %v866, 0.0
      %v1417 = vmax.f32 %v871, 0.0
      %v1418 = vmax.f32 %v876, 0.0
      %v1419 = vmax.f32 %v881, 0.0
      %v1420 = vmax.f32 %v886, 0.0
      %v1421 = vmax.f32 %v891, 0.0
      %v1422 = vmax.f32 %v896, 0.0
      %v1423 = vmax.f32 %v901, 0.0
      %v1424 = vmax.f32 %v906, 0.0
      %v1425 = vmax.f32 %v911, 0.0
      %v1426 = vmax.f32 %v916, 0.0
      %v1427 = vmax.f32 %v921, 0.0
      %v1428 = vmax.f32 %v926, 0.0
      %v1429 = vmax.f32 %v931, 0.0
      %v1430 = vmax.f32 %v936, 0.0
      %v1431 = vmax.f32 %v941, 0.0
      %v1432 = vmax.f32 %v946, 0.0
      %v1433 = vmax.f32 %v951, 0.0
      %v1434 = vmax.f32 %v956, 0.0
      %v1435 = vmax.f32 %v961, 0.0
      %v1436 = vmax.f32 %v966, 0.0
      %v1437 = vmax.f32 %v971, 0.0
      %v1438 = vmax.f32 %v976, 0.0
      %v1439 = vmax.f32 %v981, 0.0
      %v1440 = vmax.f32 %v986, 0.0
      %v1441 = vmax.f32 %v991, 0.0
      %v1442 = vmax.f32 %v996, 0.0
      %v1443 = vmax.f32 %v1001, 0.0
      %v1444 = vmax.f32 %v1006, 0.0
      %v1445 = vmax.f32 %v1011, 0.0
      %v1446 = vmax.f32 %v1016, 0.0
      %v1447 = vmax.f32 %v1021, 0.0
      %v1448 = vmax.f32 %v1026, 0.0
      %v1449 = vmax.f32 %v1031, 0.0
      %v1450 = vmax.f32 %v1036, 0.0
      %v1451 = vmax.f32 %v1041, 0.0
      %v1452 = vmax.f32 %v1046, 0.0
      %v1453 = vmax.f32 %v1051, 0.0
      %v1454 = vmax.f32 %v1056, 0.0
      %v1455 = vmax.f32 %v1061, 0.0
      %v1456 = vmax.f32 %v1066, 0.0
      %v1457 = vmax.f32 %v1071, 0.0
      %v1458 = vmax.f32 %v1076, 0.0
      %v1459 = vmax.f32 %v1081, 0.0
      %v1460 = vmax.f32 %v1086, 0.0
      %v1461 = vmax.f32 %v1091, 0.0
      %v1462 = vmax.f32 %v1096, 0.0
      %v1463 = vmax.f32 %v1101, 0.0
      %v1464 = vmax.f32 %v1106, 0.0
      %v1465 = vmax.f32 %v1111, 0.0
      %v1466 = vmax.f32 %v1116, 0.0
      %v1467 = vmax.f32 %v1121, 0.0
      %v1468 = vmax.f32 %v1126, 0.0
      %v1469 = vmax.f32 %v1131, 0.0
      %v1470 = vmax.f32 %v1136, 0.0
      %v1471 = vmax.f32 %v1141, 0.0
      %v1472 = vmax.f32 %v1146, 0.0
      %v1473 = vmax.f32 %v1151, 0.0
      %v1474 = vmax.f32 %v1156, 0.0
      %v1475 = vmax.f32 %v1161, 0.0
      %v1476 = vmax.f32 %v1166, 0.0
      %v1477 = vmax.f32 %v1171, 0.0
      %v1478 = vmax.f32 %v1176, 0.0
      %v1479 = vmax.f32 %v1181, 0.0
      %v1480 = vmax.f32 %v1186, 0.0
      %v1481 = vmax.f32 %v1191, 0.0
      %v1482 = vmax.f32 %v1196, 0.0
      %v1483 = vmax.f32 %v1201, 0.0
      %v1484 = vmax.f32 %v1206, 0.0
      %v1485 = vmax.f32 %v1211, 0.0
      %v1486 = vmax.f32 %v1216, 0.0
      %v1487 = vmax.f32 %v1221, 0.0
      %v1488 = vmax.f32 %v1226, 0.0
      %v1489 = vmax.f32 %v1231, 0.0
      %v1490 = vmax.f32 %v1236, 0.0
      %v1491 = vmax.f32 %v1241, 0.0
      %v1492 = vmax.f32 %v1246, 0.0
      %v1493 = vmax.f32 %v1251, 0.0
      %v1494 = vmax.f32 %v1256, 0.0
      %v1495 = vmax.f32 %v1261, 0.0
      %v1496 = vmax.f32 %v1266, 0.0
      %v1497 = vmax.f32 %v1271, 0.0
      %v1498 = vmax.f32 %v1276, 0.0
      %v1499 = vmax.f32 %v1281, 0.0
      %v1500 = vmax.f32 %v1286, 0.0
      %v1501 = vmax.f32 %v1291, 0.0
      %v1502 = vmax.f32 %v1296, 0.0
      %v1503 = vmax.f32 %v1301, 0.0
      %v1504 = vmax.f32 %v1306, 0.0
      %v1505 = vmax.f32 %v1311, 0.0
      %v1506 = vmax.f32 %v1316, 0.0
      %v1507 = vmax.f32 %v1321, 0.0
      %v1508 = vmax.f32 %v1326, 0.0
      %v1509 = vmax.f32 %v1331, 0.0
      %v1510 = vmax.f32 %v1336, 0.0
      %v1511 = vmax.f32 %v1341, 0.0
      %v1512 = vmax.f32 %v1346, 0.0
      %v1513 = vmax.f32 %v1351, 0.0
      %v1514 = vmax.f32 %v1356, 0.0
      %v1515 = vmax.f32 %v1361, 0.0
      %v1516 = vmax.f32 %v1366, 0.0
      %v1517 = vmax.f32 %v1371, 0.0
      %v1518 = vmax.f32 %v1376, 0.0
      %v1519 = vmax.f32 %v1381, 0.0
      %v1520 = vmax.f32 %v1386, 0.0
      %v1521 = vmax.f32 %v1391, 0.0
      %v1522 = vld [vmem:[%s2] sm:$0xff]
      %v1523 = vld [vmem:[%s2 + $0x8] sm:$0xff]
      %v1524 = vld [vmem:[%s2 + $0x10] sm:$0xff]
      %v1525 = vld [vmem:[%s2 + $0x18] sm:$0xff]
      %v1526 = vld [vmem:[%s2 + $0x20] sm:$0xff]
      %v1527 = vld [vmem:[%s2 + $0x28] sm:$0xff]
      %v1528 = vld [vmem:[%s2 + $0x30] sm:$0xff]
      %v1529 = vld [vmem:[%s2 + $0x38] sm:$0xff]
      %vm1530 = vcmask 523264
      %v1532 = vsel %vm1530, %v1394, 0
      %v1535 = vsel %vm1530, %v1395, 0
      %v1538 = vsel %vm1530, %v1396, 0
      %v1541 = vsel %vm1530, %v1397, 0
      %v1544 = vsel %vm1530, %v1398, 0
      %v1547 = vsel %vm1530, %v1399, 0
      %v1550 = vsel %vm1530, %v1400, 0
      %v1553 = vsel %vm1530, %v1401, 0
      %v1556 = vsel %vm1530, %v1402, 0
      %v1559 = vsel %vm1530, %v1403, 0
      %v1562 = vsel %vm1530, %v1404, 0
      %v1565 = vsel %vm1530, %v1405, 0
      %v1568 = vsel %vm1530, %v1406, 0
      %v1571 = vsel %vm1530, %v1407, 0
      %v1574 = vsel %vm1530, %v1408, 0
      %v1577 = vsel %vm1530, %v1409, 0
      %v1580 = vsel %vm1530, %v1410, 0
      %v1583 = vsel %vm1530, %v1411, 0
      %v1586 = vsel %vm1530, %v1412, 0
      %v1589 = vsel %vm1530, %v1413, 0
      %v1592 = vsel %vm1530, %v1414, 0
      %v1595 = vsel %vm1530, %v1415, 0
      %v1598 = vsel %vm1530, %v1416, 0
      %v1601 = vsel %vm1530, %v1417, 0
      %v1604 = vsel %vm1530, %v1418, 0
      %v1607 = vsel %vm1530, %v1419, 0
      %v1610 = vsel %vm1530, %v1420, 0
      %v1613 = vsel %vm1530, %v1421, 0
      %v1616 = vsel %vm1530, %v1422, 0
      %v1619 = vsel %vm1530, %v1423, 0
      %v1622 = vsel %vm1530, %v1424, 0
      %v1625 = vsel %vm1530, %v1425, 0
      %v1628 = vsel %vm1530, %v1426, 0
      %v1631 = vsel %vm1530, %v1427, 0
      %v1634 = vsel %vm1530, %v1428, 0
      %v1637 = vsel %vm1530, %v1429, 0
      %v1640 = vsel %vm1530, %v1430, 0
      %v1643 = vsel %vm1530, %v1431, 0
      %v1646 = vsel %vm1530, %v1432, 0
      %v1649 = vsel %vm1530, %v1433, 0
      %v1652 = vsel %vm1530, %v1434, 0
      %v1655 = vsel %vm1530, %v1435, 0
      %v1658 = vsel %vm1530, %v1436, 0
      %v1661 = vsel %vm1530, %v1437, 0
      %v1664 = vsel %vm1530, %v1438, 0
      %v1667 = vsel %vm1530, %v1439, 0
      %v1670 = vsel %vm1530, %v1440, 0
      %v1673 = vsel %vm1530, %v1441, 0
      %v1676 = vsel %vm1530, %v1442, 0
      %v1679 = vsel %vm1530, %v1443, 0
      %v1682 = vsel %vm1530, %v1444, 0
      %v1685 = vsel %vm1530, %v1445, 0
      %v1688 = vsel %vm1530, %v1446, 0
      %v1691 = vsel %vm1530, %v1447, 0
      %v1694 = vsel %vm1530, %v1448, 0
      %v1697 = vsel %vm1530, %v1449, 0
      %v1700 = vsel %vm1530, %v1450, 0
      %v1703 = vsel %vm1530, %v1451, 0
      %v1706 = vsel %vm1530, %v1452, 0
      %v1709 = vsel %vm1530, %v1453, 0
      %v1712 = vsel %vm1530, %v1454, 0
      %v1715 = vsel %vm1530, %v1455, 0
      %v1718 = vsel %vm1530, %v1456, 0
      %v1721 = vsel %vm1530, %v1457, 0
      %v1724 = vsel %vm1530, %v1458, 0
      %v1727 = vsel %vm1530, %v1459, 0
      %v1730 = vsel %vm1530, %v1460, 0
      %v1733 = vsel %vm1530, %v1461, 0
      %v1736 = vsel %vm1530, %v1462, 0
      %v1739 = vsel %vm1530, %v1463, 0
      %v1742 = vsel %vm1530, %v1464, 0
      %v1745 = vsel %vm1530, %v1465, 0
      %v1748 = vsel %vm1530, %v1466, 0
      %v1751 = vsel %vm1530, %v1467, 0
      %v1754 = vsel %vm1530, %v1468, 0
      %v1757 = vsel %vm1530, %v1469, 0
      %v1760 = vsel %vm1530, %v1470, 0
      %v1763 = vsel %vm1530, %v1471, 0
      %v1766 = vsel %vm1530, %v1472, 0
      %v1769 = vsel %vm1530, %v1473, 0
      %v1772 = vsel %vm1530, %v1474, 0
      %v1775 = vsel %vm1530, %v1475, 0
      %v1778 = vsel %vm1530, %v1476, 0
      %v1781 = vsel %vm1530, %v1477, 0
      %v1784 = vsel %vm1530, %v1478, 0
      %v1787 = vsel %vm1530, %v1479, 0
      %v1790 = vsel %vm1530, %v1480, 0
      %v1793 = vsel %vm1530, %v1481, 0
      %v1796 = vsel %vm1530, %v1482, 0
      %v1799 = vsel %vm1530, %v1483, 0
      %v1802 = vsel %vm1530, %v1484, 0
      %v1805 = vsel %vm1530, %v1485, 0
      %v1808 = vsel %vm1530, %v1486, 0
      %v1811 = vsel %vm1530, %v1487, 0
      %v1814 = vsel %vm1530, %v1488, 0
      %v1817 = vsel %vm1530, %v1489, 0
      %v1820 = vsel %vm1530, %v1490, 0
      %v1823 = vsel %vm1530, %v1491, 0
      %v1826 = vsel %vm1530, %v1492, 0
      %v1829 = vsel %vm1530, %v1493, 0
      %v1832 = vsel %vm1530, %v1494, 0
      %v1835 = vsel %vm1530, %v1495, 0
      %v1838 = vsel %vm1530, %v1496, 0
      %v1841 = vsel %vm1530, %v1497, 0
      %v1844 = vsel %vm1530, %v1498, 0
      %v1847 = vsel %vm1530, %v1499, 0
      %v1850 = vsel %vm1530, %v1500, 0
      %v1853 = vsel %vm1530, %v1501, 0
      %v1856 = vsel %vm1530, %v1502, 0
      %v1859 = vsel %vm1530, %v1503, 0
      %v1862 = vsel %vm1530, %v1504, 0
      %v1865 = vsel %vm1530, %v1505, 0
      %v1868 = vsel %vm1530, %v1506, 0
      %v1871 = vsel %vm1530, %v1507, 0
      %v1874 = vsel %vm1530, %v1508, 0
      %v1877 = vsel %vm1530, %v1509, 0
      %v1880 = vsel %vm1530, %v1510, 0
      %v1883 = vsel %vm1530, %v1511, 0
      %v1886 = vsel %vm1530, %v1512, 0
      %v1889 = vsel %vm1530, %v1513, 0
      %v1892 = vsel %vm1530, %v1514, 0
      %v1895 = vsel %vm1530, %v1515, 0
      %v1898 = vsel %vm1530, %v1516, 0
      %v1901 = vsel %vm1530, %v1517, 0
      %v1904 = vsel %vm1530, %v1518, 0
      %v1907 = vsel %vm1530, %v1519, 0
      %v1910 = vsel %vm1530, %v1520, 0
      %v1913 = vsel %vm1530, %v1521, 0
      %1915 = vmatprep.subr.mxu0 0.0
      %1916 = vmatpush1.msra.mxu0 0.0
      %1917 = vmatprep.subr.mxu0 0.0
      %1918 = vmatpush1.msra.mxu0 0.0
      %1919 = vmatprep.subr.mxu0 0.0
      %1920 = vmatpush1.msra.mxu0 0.0
      %1921 = vmatprep.subr.mxu0 0.0
      %1922 = vmatpush1.msra.mxu0 0.0
      %1923 = vmatprep.subr.mxu0 0.0
      %1924 = vmatpush1.msra.mxu0 0.0
      %1925 = vmatprep.subr.mxu0 0.0
      %1926 = vmatpush1.msra.mxu0 0.0
      %1927 = vmatprep.subr.mxu0 0.0
      %1928 = vmatpush1.msra.mxu0 0.0
      %1929 = vmatprep.subr.mxu0 0.0
      %1930 = vmatpush1.msra.mxu0 0.0
      %1931 = vmatprep.subr.mxu0 0.0
      %1932 = vmatpush1.msra.mxu0 %v1529
      %1933 = vmatprep.subr.mxu0 0.0
      %1934 = vmatpush1.msra.mxu0 %v1528
      %1935 = vmatprep.subr.mxu0 0.0
      %1936 = vmatpush1.msra.mxu0 %v1527
      %1937 = vmatprep.subr.mxu0 0.0
      %1938 = vmatpush1.msra.mxu0 %v1526
      %1939 = vmatprep.subr.mxu0 0.0
      %1940 = vmatpush1.msra.mxu0 %v1525
      %1941 = vmatprep.subr.mxu0 0.0
      %1942 = vmatpush1.msra.mxu0 %v1524
      %1943 = vmatprep.subr.mxu0 0.0
      %1944 = vmatpush1.msra.mxu0 %v1523
      %1945 = vmatprep.subr.mxu0 0.0
      %1946 = vmatpush1.msra.mxu0 %v1522
      %1947 = vmatprep.subr.mxu0 0.0
      %1948 = vmatpush2.msra.mxu0 0.0
      %1949 = vmatprep.subr.mxu0 0.0
      %1950 = vmatpush2.msra.mxu0 0.0
      %1951 = vmatprep.subr.mxu0 0.0
      %1952 = vmatpush2.msra.mxu0 0.0
      %1953 = vmatprep.subr.mxu0 0.0
      %1954 = vmatpush2.msra.mxu0 0.0
      %1955 = vmatprep.subr.mxu0 0.0
      %1956 = vmatpush2.msra.mxu0 0.0
      %1957 = vmatprep.subr.mxu0 0.0
      %1958 = vmatpush2.msra.mxu0 0.0
      %1959 = vmatprep.subr.mxu0 0.0
      %1960 = vmatpush2.msra.mxu0 0.0
      %1961 = vmatprep.subr.mxu0 0.0
      %1962 = vmatpush2.msra.mxu0 0.0
      %1963 = vmatprep.subr.mxu0 0.0
      %1964 = vmatpush2.msra.mxu0 0.0
      %1965 = vmatprep.subr.mxu0 0.0
      %1966 = vmatpush2.msra.mxu0 0.0
      %1967 = vmatprep.subr.mxu0 0.0
      %1968 = vmatpush2.msra.mxu0 0.0
      %1969 = vmatprep.subr.mxu0 0.0
      %1970 = vmatpush2.msra.mxu0 0.0
      %1971 = vmatprep.subr.mxu0 0.0
      %1972 = vmatpush2.msra.mxu0 0.0
      %1973 = vmatprep.subr.mxu0 0.0
      %1974 = vmatpush2.msra.mxu0 0.0
      %1975 = vmatprep.subr.mxu0 0.0
      %1976 = vmatpush2.msra.mxu0 0.0
      %1977 = vmatprep.subr.mxu0 0.0
      %1978 = vmatpush2.msra.mxu0 0.0
      %1979 = vmatprep.mubr.f32.mxu0 0.0
      %1980 = vmatmul.mubr.f32.gmra.mxu0 %v1532
      %v1981 = vpop.f32.mrf.mxu0
      %v1982 = vadd.f32 0.0, %v1981
      %v1983 = vpop.f32.mrf.mxu0
      %1984 = vmatprep.mubr.f32.mxu0 0.0
      %1985 = vmatmul.mubr.f32.gmra.mxu0 %v1535
      %v1986 = vpop.f32.mrf.mxu0
      %v1987 = vadd.f32 0.0, %v1986
      %v1988 = vpop.f32.mrf.mxu0
      %1989 = vmatprep.mubr.f32.mxu0 0.0
      %1990 = vmatmul.mubr.f32.gmra.mxu0 %v1538
      %v1991 = vpop.f32.mrf.mxu0
      %v1992 = vadd.f32 0.0, %v1991
      %v1993 = vpop.f32.mrf.mxu0
      %1994 = vmatprep.mubr.f32.mxu0 0.0
      %1995 = vmatmul.mubr.f32.gmra.mxu0 %v1541
      %v1996 = vpop.f32.mrf.mxu0
      %v1997 = vadd.f32 0.0, %v1996
      %v1998 = vpop.f32.mrf.mxu0
      %1999 = vmatprep.mubr.f32.mxu0 0.0
      %2000 = vmatmul.mubr.f32.gmra.mxu0 %v1544
      %v2001 = vpop.f32.mrf.mxu0
      %v2002 = vadd.f32 0.0, %v2001
      %v2003 = vpop.f32.mrf.mxu0
      %2004 = vmatprep.mubr.f32.mxu0 0.0
      %2005 = vmatmul.mubr.f32.gmra.mxu0 %v1547
      %v2006 = vpop.f32.mrf.mxu0
      %v2007 = vadd.f32 0.0, %v2006
      %v2008 = vpop.f32.mrf.mxu0
      %2009 = vmatprep.mubr.f32.mxu0 0.0
      %2010 = vmatmul.mubr.f32.gmra.mxu0 %v1550
      %v2011 = vpop.f32.mrf.mxu0
      %v2012 = vadd.f32 0.0, %v2011
      %v2013 = vpop.f32.mrf.mxu0
      %2014 = vmatprep.mubr.f32.mxu0 0.0
      %2015 = vmatmul.mubr.f32.gmra.mxu0 %v1553
      %v2016 = vpop.f32.mrf.mxu0
      %v2017 = vadd.f32 0.0, %v2016
      %v2018 = vpop.f32.mrf.mxu0
      %2019 = vmatprep.mubr.f32.mxu0 0.0
      %2020 = vmatmul.mubr.f32.gmra.mxu0 %v1556
      %v2021 = vpop.f32.mrf.mxu0
      %v2022 = vadd.f32 0.0, %v2021
      %v2023 = vpop.f32.mrf.mxu0
      %2024 = vmatprep.mubr.f32.mxu0 0.0
      %2025 = vmatmul.mubr.f32.gmra.mxu0 %v1559
      %v2026 = vpop.f32.mrf.mxu0
      %v2027 = vadd.f32 0.0, %v2026
      %v2028 = vpop.f32.mrf.mxu0
      %2029 = vmatprep.mubr.f32.mxu0 0.0
      %2030 = vmatmul.mubr.f32.gmra.mxu0 %v1562
      %v2031 = vpop.f32.mrf.mxu0
      %v2032 = vadd.f32 0.0, %v2031
      %v2033 = vpop.f32.mrf.mxu0
      %2034 = vmatprep.mubr.f32.mxu0 0.0
      %2035 = vmatmul.mubr.f32.gmra.mxu0 %v1565
      %v2036 = vpop.f32.mrf.mxu0
      %v2037 = vadd.f32 0.0, %v2036
      %v2038 = vpop.f32.mrf.mxu0
      %2039 = vmatprep.mubr.f32.mxu0 0.0
      %2040 = vmatmul.mubr.f32.gmra.mxu0 %v1568
      %v2041 = vpop.f32.mrf.mxu0
      %v2042 = vadd.f32 0.0, %v2041
      %v2043 = vpop.f32.mrf.mxu0
      %2044 = vmatprep.mubr.f32.mxu0 0.0
      %2045 = vmatmul.mubr.f32.gmra.mxu0 %v1571
      %v2046 = vpop.f32.mrf.mxu0
      %v2047 = vadd.f32 0.0, %v2046
      %v2048 = vpop.f32.mrf.mxu0
      %2049 = vmatprep.mubr.f32.mxu0 0.0
      %2050 = vmatmul.mubr.f32.gmra.mxu0 %v1574
      %v2051 = vpop.f32.mrf.mxu0
      %v2052 = vadd.f32 0.0, %v2051
      %v2053 = vpop.f32.mrf.mxu0
      %2054 = vmatprep.mubr.f32.mxu0 0.0
      %2055 = vmatmul.mubr.f32.gmra.mxu0 %v1577
      %v2056 = vpop.f32.mrf.mxu0
      %v2057 = vadd.f32 0.0, %v2056
      %v2058 = vpop.f32.mrf.mxu0
      %2059 = vmatprep.mubr.f32.mxu0 0.0
      %2060 = vmatmul.mubr.f32.gmra.mxu0 %v1580
      %v2061 = vpop.f32.mrf.mxu0
      %v2062 = vadd.f32 0.0, %v2061
      %v2063 = vpop.f32.mrf.mxu0
      %2064 = vmatprep.mubr.f32.mxu0 0.0
      %2065 = vmatmul.mubr.f32.gmra.mxu0 %v1583
      %v2066 = vpop.f32.mrf.mxu0
      %v2067 = vadd.f32 0.0, %v2066
      %v2068 = vpop.f32.mrf.mxu0
      %2069 = vmatprep.mubr.f32.mxu0 0.0
      %2070 = vmatmul.mubr.f32.gmra.mxu0 %v1586
      %v2071 = vpop.f32.mrf.mxu0
      %v2072 = vadd.f32 0.0, %v2071
      %v2073 = vpop.f32.mrf.mxu0
      %2074 = vmatprep.mubr.f32.mxu0 0.0
      %2075 = vmatmul.mubr.f32.gmra.mxu0 %v1589
      %v2076 = vpop.f32.mrf.mxu0
      %v2077 = vadd.f32 0.0, %v2076
      %v2078 = vpop.f32.mrf.mxu0
      %2079 = vmatprep.mubr.f32.mxu0 0.0
      %2080 = vmatmul.mubr.f32.gmra.mxu0 %v1592
      %v2081 = vpop.f32.mrf.mxu0
      %v2082 = vadd.f32 0.0, %v2081
      %v2083 = vpop.f32.mrf.mxu0
      %2084 = vmatprep.mubr.f32.mxu0 0.0
      %2085 = vmatmul.mubr.f32.gmra.mxu0 %v1595
      %v2086 = vpop.f32.mrf.mxu0
      %v2087 = vadd.f32 0.0, %v2086
      %v2088 = vpop.f32.mrf.mxu0
      %2089 = vmatprep.mubr.f32.mxu0 0.0
      %2090 = vmatmul.mubr.f32.gmra.mxu0 %v1598
      %v2091 = vpop.f32.mrf.mxu0
      %v2092 = vadd.f32 0.0, %v2091
      %v2093 = vpop.f32.mrf.mxu0
      %2094 = vmatprep.mubr.f32.mxu0 0.0
      %2095 = vmatmul.mubr.f32.gmra.mxu0 %v1601
      %v2096 = vpop.f32.mrf.mxu0
      %v2097 = vadd.f32 0.0, %v2096
      %v2098 = vpop.f32.mrf.mxu0
      %2099 = vmatprep.mubr.f32.mxu0 0.0
      %2100 = vmatmul.mubr.f32.gmra.mxu0 %v1604
      %v2101 = vpop.f32.mrf.mxu0
      %v2102 = vadd.f32 0.0, %v2101
      %v2103 = vpop.f32.mrf.mxu0
      %2104 = vmatprep.mubr.f32.mxu0 0.0
      %2105 = vmatmul.mubr.f32.gmra.mxu0 %v1607
      %v2106 = vpop.f32.mrf.mxu0
      %v2107 = vadd.f32 0.0, %v2106
      %v2108 = vpop.f32.mrf.mxu0
      %2109 = vmatprep.mubr.f32.mxu0 0.0
      %2110 = vmatmul.mubr.f32.gmra.mxu0 %v1610
      %v2111 = vpop.f32.mrf.mxu0
      %v2112 = vadd.f32 0.0, %v2111
      %v2113 = vpop.f32.mrf.mxu0
      %2114 = vmatprep.mubr.f32.mxu0 0.0
      %2115 = vmatmul.mubr.f32.gmra.mxu0 %v1613
      %v2116 = vpop.f32.mrf.mxu0
      %v2117 = vadd.f32 0.0, %v2116
      %v2118 = vpop.f32.mrf.mxu0
      %2119 = vmatprep.mubr.f32.mxu0 0.0
      %2120 = vmatmul.mubr.f32.gmra.mxu0 %v1616
      %v2121 = vpop.f32.mrf.mxu0
      %v2122 = vadd.f32 0.0, %v2121
      %v2123 = vpop.f32.mrf.mxu0
      %2124 = vmatprep.mubr.f32.mxu0 0.0
      %2125 = vmatmul.mubr.f32.gmra.mxu0 %v1619
      %v2126 = vpop.f32.mrf.mxu0
      %v2127 = vadd.f32 0.0, %v2126
      %v2128 = vpop.f32.mrf.mxu0
      %2129 = vmatprep.mubr.f32.mxu0 0.0
      %2130 = vmatmul.mubr.f32.gmra.mxu0 %v1622
      %v2131 = vpop.f32.mrf.mxu0
      %v2132 = vadd.f32 0.0, %v2131
      %v2133 = vpop.f32.mrf.mxu0
      %2134 = vmatprep.mubr.f32.mxu0 0.0
      %2135 = vmatmul.mubr.f32.gmra.mxu0 %v1625
      %v2136 = vpop.f32.mrf.mxu0
      %v2137 = vadd.f32 0.0, %v2136
      %v2138 = vpop.f32.mrf.mxu0
      %2139 = vmatprep.mubr.f32.mxu0 0.0
      %2140 = vmatmul.mubr.f32.gmra.mxu0 %v1628
      %v2141 = vpop.f32.mrf.mxu0
      %v2142 = vadd.f32 0.0, %v2141
      %v2143 = vpop.f32.mrf.mxu0
      %2144 = vmatprep.mubr.f32.mxu0 0.0
      %2145 = vmatmul.mubr.f32.gmra.mxu0 %v1631
      %v2146 = vpop.f32.mrf.mxu0
      %v2147 = vadd.f32 0.0, %v2146
      %v2148 = vpop.f32.mrf.mxu0
      %2149 = vmatprep.mubr.f32.mxu0 0.0
      %2150 = vmatmul.mubr.f32.gmra.mxu0 %v1634
      %v2151 = vpop.f32.mrf.mxu0
      %v2152 = vadd.f32 0.0, %v2151
      %v2153 = vpop.f32.mrf.mxu0
      %2154 = vmatprep.mubr.f32.mxu0 0.0
      %2155 = vmatmul.mubr.f32.gmra.mxu0 %v1637
      %v2156 = vpop.f32.mrf.mxu0
      %v2157 = vadd.f32 0.0, %v2156
      %v2158 = vpop.f32.mrf.mxu0
      %2159 = vmatprep.mubr.f32.mxu0 0.0
      %2160 = vmatmul.mubr.f32.gmra.mxu0 %v1640
      %v2161 = vpop.f32.mrf.mxu0
      %v2162 = vadd.f32 0.0, %v2161
      %v2163 = vpop.f32.mrf.mxu0
      %2164 = vmatprep.mubr.f32.mxu0 0.0
      %2165 = vmatmul.mubr.f32.gmra.mxu0 %v1643
      %v2166 = vpop.f32.mrf.mxu0
      %v2167 = vadd.f32 0.0, %v2166
      %v2168 = vpop.f32.mrf.mxu0
      %2169 = vmatprep.mubr.f32.mxu0 0.0
      %2170 = vmatmul.mubr.f32.gmra.mxu0 %v1646
      %v2171 = vpop.f32.mrf.mxu0
      %v2172 = vadd.f32 0.0, %v2171
      %v2173 = vpop.f32.mrf.mxu0
      %2174 = vmatprep.mubr.f32.mxu0 0.0
      %2175 = vmatmul.mubr.f32.gmra.mxu0 %v1649
      %v2176 = vpop.f32.mrf.mxu0
      %v2177 = vadd.f32 0.0, %v2176
      %v2178 = vpop.f32.mrf.mxu0
      %2179 = vmatprep.mubr.f32.mxu0 0.0
      %2180 = vmatmul.mubr.f32.gmra.mxu0 %v1652
      %v2181 = vpop.f32.mrf.mxu0
      %v2182 = vadd.f32 0.0, %v2181
      %v2183 = vpop.f32.mrf.mxu0
      %2184 = vmatprep.mubr.f32.mxu0 0.0
      %2185 = vmatmul.mubr.f32.gmra.mxu0 %v1655
      %v2186 = vpop.f32.mrf.mxu0
      %v2187 = vadd.f32 0.0, %v2186
      %v2188 = vpop.f32.mrf.mxu0
      %2189 = vmatprep.mubr.f32.mxu0 0.0
      %2190 = vmatmul.mubr.f32.gmra.mxu0 %v1658
      %v2191 = vpop.f32.mrf.mxu0
      %v2192 = vadd.f32 0.0, %v2191
      %v2193 = vpop.f32.mrf.mxu0
      %2194 = vmatprep.mubr.f32.mxu0 0.0
      %2195 = vmatmul.mubr.f32.gmra.mxu0 %v1661
      %v2196 = vpop.f32.mrf.mxu0
      %v2197 = vadd.f32 0.0, %v2196
      %v2198 = vpop.f32.mrf.mxu0
      %2199 = vmatprep.mubr.f32.mxu0 0.0
      %2200 = vmatmul.mubr.f32.gmra.mxu0 %v1664
      %v2201 = vpop.f32.mrf.mxu0
      %v2202 = vadd.f32 0.0, %v2201
      %v2203 = vpop.f32.mrf.mxu0
      %2204 = vmatprep.mubr.f32.mxu0 0.0
      %2205 = vmatmul.mubr.f32.gmra.mxu0 %v1667
      %v2206 = vpop.f32.mrf.mxu0
      %v2207 = vadd.f32 0.0, %v2206
      %v2208 = vpop.f32.mrf.mxu0
      %2209 = vmatprep.mubr.f32.mxu0 0.0
      %2210 = vmatmul.mubr.f32.gmra.mxu0 %v1670
      %v2211 = vpop.f32.mrf.mxu0
      %v2212 = vadd.f32 0.0, %v2211
      %v2213 = vpop.f32.mrf.mxu0
      %2214 = vmatprep.mubr.f32.mxu0 0.0
      %2215 = vmatmul.mubr.f32.gmra.mxu0 %v1673
      %v2216 = vpop.f32.mrf.mxu0
      %v2217 = vadd.f32 0.0, %v2216
      %v2218 = vpop.f32.mrf.mxu0
      %2219 = vmatprep.mubr.f32.mxu0 0.0
      %2220 = vmatmul.mubr.f32.gmra.mxu0 %v1676
      %v2221 = vpop.f32.mrf.mxu0
      %v2222 = vadd.f32 0.0, %v2221
      %v2223 = vpop.f32.mrf.mxu0
      %2224 = vmatprep.mubr.f32.mxu0 0.0
      %2225 = vmatmul.mubr.f32.gmra.mxu0 %v1679
      %v2226 = vpop.f32.mrf.mxu0
      %v2227 = vadd.f32 0.0, %v2226
      %v2228 = vpop.f32.mrf.mxu0
      %2229 = vmatprep.mubr.f32.mxu0 0.0
      %2230 = vmatmul.mubr.f32.gmra.mxu0 %v1682
      %v2231 = vpop.f32.mrf.mxu0
      %v2232 = vadd.f32 0.0, %v2231
      %v2233 = vpop.f32.mrf.mxu0
      %2234 = vmatprep.mubr.f32.mxu0 0.0
      %2235 = vmatmul.mubr.f32.gmra.mxu0 %v1685
      %v2236 = vpop.f32.mrf.mxu0
      %v2237 = vadd.f32 0.0, %v2236
      %v2238 = vpop.f32.mrf.mxu0
      %2239 = vmatprep.mubr.f32.mxu0 0.0
      %2240 = vmatmul.mubr.f32.gmra.mxu0 %v1688
      %v2241 = vpop.f32.mrf.mxu0
      %v2242 = vadd.f32 0.0, %v2241
      %v2243 = vpop.f32.mrf.mxu0
      %2244 = vmatprep.mubr.f32.mxu0 0.0
      %2245 = vmatmul.mubr.f32.gmra.mxu0 %v1691
      %v2246 = vpop.f32.mrf.mxu0
      %v2247 = vadd.f32 0.0, %v2246
      %v2248 = vpop.f32.mrf.mxu0
      %2249 = vmatprep.mubr.f32.mxu0 0.0
      %2250 = vmatmul.mubr.f32.gmra.mxu0 %v1694
      %v2251 = vpop.f32.mrf.mxu0
      %v2252 = vadd.f32 0.0, %v2251
      %v2253 = vpop.f32.mrf.mxu0
      %2254 = vmatprep.mubr.f32.mxu0 0.0
      %2255 = vmatmul.mubr.f32.gmra.mxu0 %v1697
      %v2256 = vpop.f32.mrf.mxu0
      %v2257 = vadd.f32 0.0, %v2256
      %v2258 = vpop.f32.mrf.mxu0
      %2259 = vmatprep.mubr.f32.mxu0 0.0
      %2260 = vmatmul.mubr.f32.gmra.mxu0 %v1700
      %v2261 = vpop.f32.mrf.mxu0
      %v2262 = vadd.f32 0.0, %v2261
      %v2263 = vpop.f32.mrf.mxu0
      %2264 = vmatprep.mubr.f32.mxu0 0.0
      %2265 = vmatmul.mubr.f32.gmra.mxu0 %v1703
      %v2266 = vpop.f32.mrf.mxu0
      %v2267 = vadd.f32 0.0, %v2266
      %v2268 = vpop.f32.mrf.mxu0
      %2269 = vmatprep.mubr.f32.mxu0 0.0
      %2270 = vmatmul.mubr.f32.gmra.mxu0 %v1706
      %v2271 = vpop.f32.mrf.mxu0
      %v2272 = vadd.f32 0.0, %v2271
      %v2273 = vpop.f32.mrf.mxu0
      %2274 = vmatprep.mubr.f32.mxu0 0.0
      %2275 = vmatmul.mubr.f32.gmra.mxu0 %v1709
      %v2276 = vpop.f32.mrf.mxu0
      %v2277 = vadd.f32 0.0, %v2276
      %v2278 = vpop.f32.mrf.mxu0
      %2279 = vmatprep.mubr.f32.mxu0 0.0
      %2280 = vmatmul.mubr.f32.gmra.mxu0 %v1712
      %v2281 = vpop.f32.mrf.mxu0
      %v2282 = vadd.f32 0.0, %v2281
      %v2283 = vpop.f32.mrf.mxu0
      %2284 = vmatprep.mubr.f32.mxu0 0.0
      %2285 = vmatmul.mubr.f32.gmra.mxu0 %v1715
      %v2286 = vpop.f32.mrf.mxu0
      %v2287 = vadd.f32 0.0, %v2286
      %v2288 = vpop.f32.mrf.mxu0
      %2289 = vmatprep.mubr.f32.mxu0 0.0
      %2290 = vmatmul.mubr.f32.gmra.mxu0 %v1718
      %v2291 = vpop.f32.mrf.mxu0
      %v2292 = vadd.f32 0.0, %v2291
      %v2293 = vpop.f32.mrf.mxu0
      %2294 = vmatprep.mubr.f32.mxu0 0.0
      %2295 = vmatmul.mubr.f32.gmra.mxu0 %v1721
      %v2296 = vpop.f32.mrf.mxu0
      %v2297 = vadd.f32 0.0, %v2296
      %v2298 = vpop.f32.mrf.mxu0
      %2299 = vmatprep.mubr.f32.mxu0 0.0
      %2300 = vmatmul.mubr.f32.gmra.mxu0 %v1724
      %v2301 = vpop.f32.mrf.mxu0
      %v2302 = vadd.f32 0.0, %v2301
      %v2303 = vpop.f32.mrf.mxu0
      %2304 = vmatprep.mubr.f32.mxu0 0.0
      %2305 = vmatmul.mubr.f32.gmra.mxu0 %v1727
      %v2306 = vpop.f32.mrf.mxu0
      %v2307 = vadd.f32 0.0, %v2306
      %v2308 = vpop.f32.mrf.mxu0
      %2309 = vmatprep.mubr.f32.mxu0 0.0
      %2310 = vmatmul.mubr.f32.gmra.mxu0 %v1730
      %v2311 = vpop.f32.mrf.mxu0
      %v2312 = vadd.f32 0.0, %v2311
      %v2313 = vpop.f32.mrf.mxu0
      %2314 = vmatprep.mubr.f32.mxu0 0.0
      %2315 = vmatmul.mubr.f32.gmra.mxu0 %v1733
      %v2316 = vpop.f32.mrf.mxu0
      %v2317 = vadd.f32 0.0, %v2316
      %v2318 = vpop.f32.mrf.mxu0
      %2319 = vmatprep.mubr.f32.mxu0 0.0
      %2320 = vmatmul.mubr.f32.gmra.mxu0 %v1736
      %v2321 = vpop.f32.mrf.mxu0
      %v2322 = vadd.f32 0.0, %v2321
      %v2323 = vpop.f32.mrf.mxu0
      %2324 = vmatprep.mubr.f32.mxu0 0.0
      %2325 = vmatmul.mubr.f32.gmra.mxu0 %v1739
      %v2326 = vpop.f32.mrf.mxu0
      %v2327 = vadd.f32 0.0, %v2326
      %v2328 = vpop.f32.mrf.mxu0
      %2329 = vmatprep.mubr.f32.mxu0 0.0
      %2330 = vmatmul.mubr.f32.gmra.mxu0 %v1742
      %v2331 = vpop.f32.mrf.mxu0
      %v2332 = vadd.f32 0.0, %v2331
      %v2333 = vpop.f32.mrf.mxu0
      %2334 = vmatprep.mubr.f32.mxu0 0.0
      %2335 = vmatmul.mubr.f32.gmra.mxu0 %v1745
      %v2336 = vpop.f32.mrf.mxu0
      %v2337 = vadd.f32 0.0, %v2336
      %v2338 = vpop.f32.mrf.mxu0
      %2339 = vmatprep.mubr.f32.mxu0 0.0
      %2340 = vmatmul.mubr.f32.gmra.mxu0 %v1748
      %v2341 = vpop.f32.mrf.mxu0
      %v2342 = vadd.f32 0.0, %v2341
      %v2343 = vpop.f32.mrf.mxu0
      %2344 = vmatprep.mubr.f32.mxu0 0.0
      %2345 = vmatmul.mubr.f32.gmra.mxu0 %v1751
      %v2346 = vpop.f32.mrf.mxu0
      %v2347 = vadd.f32 0.0, %v2346
      %v2348 = vpop.f32.mrf.mxu0
      %2349 = vmatprep.mubr.f32.mxu0 0.0
      %2350 = vmatmul.mubr.f32.gmra.mxu0 %v1754
      %v2351 = vpop.f32.mrf.mxu0
      %v2352 = vadd.f32 0.0, %v2351
      %v2353 = vpop.f32.mrf.mxu0
      %2354 = vmatprep.mubr.f32.mxu0 0.0
      %2355 = vmatmul.mubr.f32.gmra.mxu0 %v1757
      %v2356 = vpop.f32.mrf.mxu0
      %v2357 = vadd.f32 0.0, %v2356
      %v2358 = vpop.f32.mrf.mxu0
      %2359 = vmatprep.mubr.f32.mxu0 0.0
      %2360 = vmatmul.mubr.f32.gmra.mxu0 %v1760
      %v2361 = vpop.f32.mrf.mxu0
      %v2362 = vadd.f32 0.0, %v2361
      %v2363 = vpop.f32.mrf.mxu0
      %2364 = vmatprep.mubr.f32.mxu0 0.0
      %2365 = vmatmul.mubr.f32.gmra.mxu0 %v1763
      %v2366 = vpop.f32.mrf.mxu0
      %v2367 = vadd.f32 0.0, %v2366
      %v2368 = vpop.f32.mrf.mxu0
      %2369 = vmatprep.mubr.f32.mxu0 0.0
      %2370 = vmatmul.mubr.f32.gmra.mxu0 %v1766
      %v2371 = vpop.f32.mrf.mxu0
      %v2372 = vadd.f32 0.0, %v2371
      %v2373 = vpop.f32.mrf.mxu0
      %2374 = vmatprep.mubr.f32.mxu0 0.0
      %2375 = vmatmul.mubr.f32.gmra.mxu0 %v1769
      %v2376 = vpop.f32.mrf.mxu0
      %v2377 = vadd.f32 0.0, %v2376
      %v2378 = vpop.f32.mrf.mxu0
      %2379 = vmatprep.mubr.f32.mxu0 0.0
      %2380 = vmatmul.mubr.f32.gmra.mxu0 %v1772
      %v2381 = vpop.f32.mrf.mxu0
      %v2382 = vadd.f32 0.0, %v2381
      %v2383 = vpop.f32.mrf.mxu0
      %2384 = vmatprep.mubr.f32.mxu0 0.0
      %2385 = vmatmul.mubr.f32.gmra.mxu0 %v1775
      %v2386 = vpop.f32.mrf.mxu0
      %v2387 = vadd.f32 0.0, %v2386
      %v2388 = vpop.f32.mrf.mxu0
      %2389 = vmatprep.mubr.f32.mxu0 0.0
      %2390 = vmatmul.mubr.f32.gmra.mxu0 %v1778
      %v2391 = vpop.f32.mrf.mxu0
      %v2392 = vadd.f32 0.0, %v2391
      %v2393 = vpop.f32.mrf.mxu0
      %2394 = vmatprep.mubr.f32.mxu0 0.0
      %2395 = vmatmul.mubr.f32.gmra.mxu0 %v1781
      %v2396 = vpop.f32.mrf.mxu0
      %v2397 = vadd.f32 0.0, %v2396
      %v2398 = vpop.f32.mrf.mxu0
      %2399 = vmatprep.mubr.f32.mxu0 0.0
      %2400 = vmatmul.mubr.f32.gmra.mxu0 %v1784
      %v2401 = vpop.f32.mrf.mxu0
      %v2402 = vadd.f32 0.0, %v2401
      %v2403 = vpop.f32.mrf.mxu0
      %2404 = vmatprep.mubr.f32.mxu0 0.0
      %2405 = vmatmul.mubr.f32.gmra.mxu0 %v1787
      %v2406 = vpop.f32.mrf.mxu0
      %v2407 = vadd.f32 0.0, %v2406
      %v2408 = vpop.f32.mrf.mxu0
      %2409 = vmatprep.mubr.f32.mxu0 0.0
      %2410 = vmatmul.mubr.f32.gmra.mxu0 %v1790
      %v2411 = vpop.f32.mrf.mxu0
      %v2412 = vadd.f32 0.0, %v2411
      %v2413 = vpop.f32.mrf.mxu0
      %2414 = vmatprep.mubr.f32.mxu0 0.0
      %2415 = vmatmul.mubr.f32.gmra.mxu0 %v1793
      %v2416 = vpop.f32.mrf.mxu0
      %v2417 = vadd.f32 0.0, %v2416
      %v2418 = vpop.f32.mrf.mxu0
      %2419 = vmatprep.mubr.f32.mxu0 0.0
      %2420 = vmatmul.mubr.f32.gmra.mxu0 %v1796
      %v2421 = vpop.f32.mrf.mxu0
      %v2422 = vadd.f32 0.0, %v2421
      %v2423 = vpop.f32.mrf.mxu0
      %2424 = vmatprep.mubr.f32.mxu0 0.0
      %2425 = vmatmul.mubr.f32.gmra.mxu0 %v1799
      %v2426 = vpop.f32.mrf.mxu0
      %v2427 = vadd.f32 0.0, %v2426
      %v2428 = vpop.f32.mrf.mxu0
      %2429 = vmatprep.mubr.f32.mxu0 0.0
      %2430 = vmatmul.mubr.f32.gmra.mxu0 %v1802
      %v2431 = vpop.f32.mrf.mxu0
      %v2432 = vadd.f32 0.0, %v2431
      %v2433 = vpop.f32.mrf.mxu0
      %2434 = vmatprep.mubr.f32.mxu0 0.0
      %2435 = vmatmul.mubr.f32.gmra.mxu0 %v1805
      %v2436 = vpop.f32.mrf.mxu0
      %v2437 = vadd.f32 0.0, %v2436
      %v2438 = vpop.f32.mrf.mxu0
      %2439 = vmatprep.mubr.f32.mxu0 0.0
      %2440 = vmatmul.mubr.f32.gmra.mxu0 %v1808
      %v2441 = vpop.f32.mrf.mxu0
      %v2442 = vadd.f32 0.0, %v2441
      %v2443 = vpop.f32.mrf.mxu0
      %2444 = vmatprep.mubr.f32.mxu0 0.0
      %2445 = vmatmul.mubr.f32.gmra.mxu0 %v1811
      %v2446 = vpop.f32.mrf.mxu0
      %v2447 = vadd.f32 0.0, %v2446
      %v2448 = vpop.f32.mrf.mxu0
      %2449 = vmatprep.mubr.f32.mxu0 0.0
      %2450 = vmatmul.mubr.f32.gmra.mxu0 %v1814
      %v2451 = vpop.f32.mrf.mxu0
      %v2452 = vadd.f32 0.0, %v2451
      %v2453 = vpop.f32.mrf.mxu0
      %2454 = vmatprep.mubr.f32.mxu0 0.0
      %2455 = vmatmul.mubr.f32.gmra.mxu0 %v1817
      %v2456 = vpop.f32.mrf.mxu0
      %v2457 = vadd.f32 0.0, %v2456
      %v2458 = vpop.f32.mrf.mxu0
      %2459 = vmatprep.mubr.f32.mxu0 0.0
      %2460 = vmatmul.mubr.f32.gmra.mxu0 %v1820
      %v2461 = vpop.f32.mrf.mxu0
      %v2462 = vadd.f32 0.0, %v2461
      %v2463 = vpop.f32.mrf.mxu0
      %2464 = vmatprep.mubr.f32.mxu0 0.0
      %2465 = vmatmul.mubr.f32.gmra.mxu0 %v1823
      %v2466 = vpop.f32.mrf.mxu0
      %v2467 = vadd.f32 0.0, %v2466
      %v2468 = vpop.f32.mrf.mxu0
      %2469 = vmatprep.mubr.f32.mxu0 0.0
      %2470 = vmatmul.mubr.f32.gmra.mxu0 %v1826
      %v2471 = vpop.f32.mrf.mxu0
      %v2472 = vadd.f32 0.0, %v2471
      %v2473 = vpop.f32.mrf.mxu0
      %2474 = vmatprep.mubr.f32.mxu0 0.0
      %2475 = vmatmul.mubr.f32.gmra.mxu0 %v1829
      %v2476 = vpop.f32.mrf.mxu0
      %v2477 = vadd.f32 0.0, %v2476
      %v2478 = vpop.f32.mrf.mxu0
      %2479 = vmatprep.mubr.f32.mxu0 0.0
      %2480 = vmatmul.mubr.f32.gmra.mxu0 %v1832
      %v2481 = vpop.f32.mrf.mxu0
      %v2482 = vadd.f32 0.0, %v2481
      %v2483 = vpop.f32.mrf.mxu0
      %2484 = vmatprep.mubr.f32.mxu0 0.0
      %2485 = vmatmul.mubr.f32.gmra.mxu0 %v1835
      %v2486 = vpop.f32.mrf.mxu0
      %v2487 = vadd.f32 0.0, %v2486
      %v2488 = vpop.f32.mrf.mxu0
      %2489 = vmatprep.mubr.f32.mxu0 0.0
      %2490 = vmatmul.mubr.f32.gmra.mxu0 %v1838
      %v2491 = vpop.f32.mrf.mxu0
      %v2492 = vadd.f32 0.0, %v2491
      %v2493 = vpop.f32.mrf.mxu0
      %2494 = vmatprep.mubr.f32.mxu0 0.0
      %2495 = vmatmul.mubr.f32.gmra.mxu0 %v1841
      %v2496 = vpop.f32.mrf.mxu0
      %v2497 = vadd.f32 0.0, %v2496
      %v2498 = vpop.f32.mrf.mxu0
      %2499 = vmatprep.mubr.f32.mxu0 0.0
      %2500 = vmatmul.mubr.f32.gmra.mxu0 %v1844
      %v2501 = vpop.f32.mrf.mxu0
      %v2502 = vadd.f32 0.0, %v2501
      %v2503 = vpop.f32.mrf.mxu0
      %2504 = vmatprep.mubr.f32.mxu0 0.0
      %2505 = vmatmul.mubr.f32.gmra.mxu0 %v1847
      %v2506 = vpop.f32.mrf.mxu0
      %v2507 = vadd.f32 0.0, %v2506
      %v2508 = vpop.f32.mrf.mxu0
      %2509 = vmatprep.mubr.f32.mxu0 0.0
      %2510 = vmatmul.mubr.f32.gmra.mxu0 %v1850
      %v2511 = vpop.f32.mrf.mxu0
      %v2512 = vadd.f32 0.0, %v2511
      %v2513 = vpop.f32.mrf.mxu0
      %2514 = vmatprep.mubr.f32.mxu0 0.0
      %2515 = vmatmul.mubr.f32.gmra.mxu0 %v1853
      %v2516 = vpop.f32.mrf.mxu0
      %v2517 = vadd.f32 0.0, %v2516
      %v2518 = vpop.f32.mrf.mxu0
      %2519 = vmatprep.mubr.f32.mxu0 0.0
      %2520 = vmatmul.mubr.f32.gmra.mxu0 %v1856
      %v2521 = vpop.f32.mrf.mxu0
      %v2522 = vadd.f32 0.0, %v2521
      %v2523 = vpop.f32.mrf.mxu0
      %2524 = vmatprep.mubr.f32.mxu0 0.0
      %2525 = vmatmul.mubr.f32.gmra.mxu0 %v1859
      %v2526 = vpop.f32.mrf.mxu0
      %v2527 = vadd.f32 0.0, %v2526
      %v2528 = vpop.f32.mrf.mxu0
      %2529 = vmatprep.mubr.f32.mxu0 0.0
      %2530 = vmatmul.mubr.f32.gmra.mxu0 %v1862
      %v2531 = vpop.f32.mrf.mxu0
      %v2532 = vadd.f32 0.0, %v2531
      %v2533 = vpop.f32.mrf.mxu0
      %2534 = vmatprep.mubr.f32.mxu0 0.0
      %2535 = vmatmul.mubr.f32.gmra.mxu0 %v1865
      %v2536 = vpop.f32.mrf.mxu0
      %v2537 = vadd.f32 0.0, %v2536
      %v2538 = vpop.f32.mrf.mxu0
      %2539 = vmatprep.mubr.f32.mxu0 0.0
      %2540 = vmatmul.mubr.f32.gmra.mxu0 %v1868
      %v2541 = vpop.f32.mrf.mxu0
      %v2542 = vadd.f32 0.0, %v2541
      %v2543 = vpop.f32.mrf.mxu0
      %2544 = vmatprep.mubr.f32.mxu0 0.0
      %2545 = vmatmul.mubr.f32.gmra.mxu0 %v1871
      %v2546 = vpop.f32.mrf.mxu0
      %v2547 = vadd.f32 0.0, %v2546
      %v2548 = vpop.f32.mrf.mxu0
      %2549 = vmatprep.mubr.f32.mxu0 0.0
      %2550 = vmatmul.mubr.f32.gmra.mxu0 %v1874
      %v2551 = vpop.f32.mrf.mxu0
      %v2552 = vadd.f32 0.0, %v2551
      %v2553 = vpop.f32.mrf.mxu0
      %2554 = vmatprep.mubr.f32.mxu0 0.0
      %2555 = vmatmul.mubr.f32.gmra.mxu0 %v1877
      %v2556 = vpop.f32.mrf.mxu0
      %v2557 = vadd.f32 0.0, %v2556
      %v2558 = vpop.f32.mrf.mxu0
      %2559 = vmatprep.mubr.f32.mxu0 0.0
      %2560 = vmatmul.mubr.f32.gmra.mxu0 %v1880
      %v2561 = vpop.f32.mrf.mxu0
      %v2562 = vadd.f32 0.0, %v2561
      %v2563 = vpop.f32.mrf.mxu0
      %2564 = vmatprep.mubr.f32.mxu0 0.0
      %2565 = vmatmul.mubr.f32.gmra.mxu0 %v1883
      %v2566 = vpop.f32.mrf.mxu0
      %v2567 = vadd.f32 0.0, %v2566
      %v2568 = vpop.f32.mrf.mxu0
      %2569 = vmatprep.mubr.f32.mxu0 0.0
      %2570 = vmatmul.mubr.f32.gmra.mxu0 %v1886
      %v2571 = vpop.f32.mrf.mxu0
      %v2572 = vadd.f32 0.0, %v2571
      %v2573 = vpop.f32.mrf.mxu0
      %2574 = vmatprep.mubr.f32.mxu0 0.0
      %2575 = vmatmul.mubr.f32.gmra.mxu0 %v1889
      %v2576 = vpop.f32.mrf.mxu0
      %v2577 = vadd.f32 0.0, %v2576
      %v2578 = vpop.f32.mrf.mxu0
      %2579 = vmatprep.mubr.f32.mxu0 0.0
      %2580 = vmatmul.mubr.f32.gmra.mxu0 %v1892
      %v2581 = vpop.f32.mrf.mxu0
      %v2582 = vadd.f32 0.0, %v2581
      %v2583 = vpop.f32.mrf.mxu0
      %2584 = vmatprep.mubr.f32.mxu0 0.0
      %2585 = vmatmul.mubr.f32.gmra.mxu0 %v1895
      %v2586 = vpop.f32.mrf.mxu0
      %v2587 = vadd.f32 0.0, %v2586
      %v2588 = vpop.f32.mrf.mxu0
      %2589 = vmatprep.mubr.f32.mxu0 0.0
      %2590 = vmatmul.mubr.f32.gmra.mxu0 %v1898
      %v2591 = vpop.f32.mrf.mxu0
      %v2592 = vadd.f32 0.0, %v2591
      %v2593 = vpop.f32.mrf.mxu0
      %2594 = vmatprep.mubr.f32.mxu0 0.0
      %2595 = vmatmul.mubr.f32.gmra.mxu0 %v1901
      %v2596 = vpop.f32.mrf.mxu0
      %v2597 = vadd.f32 0.0, %v2596
      %v2598 = vpop.f32.mrf.mxu0
      %2599 = vmatprep.mubr.f32.mxu0 0.0
      %2600 = vmatmul.mubr.f32.gmra.mxu0 %v1904
      %v2601 = vpop.f32.mrf.mxu0
      %v2602 = vadd.f32 0.0, %v2601
      %v2603 = vpop.f32.mrf.mxu0
      %2604 = vmatprep.mubr.f32.mxu0 0.0
      %2605 = vmatmul.mubr.f32.gmra.mxu0 %v1907
      %v2606 = vpop.f32.mrf.mxu0
      %v2607 = vadd.f32 0.0, %v2606
      %v2608 = vpop.f32.mrf.mxu0
      %2609 = vmatprep.mubr.f32.mxu0 0.0
      %2610 = vmatmul.mubr.f32.gmra.mxu0 %v1910
      %v2611 = vpop.f32.mrf.mxu0
      %v2612 = vadd.f32 0.0, %v2611
      %v2613 = vpop.f32.mrf.mxu0
      %2614 = vmatprep.mubr.f32.mxu0 0.0
      %2615 = vmatmul.mubr.f32.gmra.mxu0 %v1913
      %v2616 = vpop.f32.mrf.mxu0
      %v2617 = vadd.f32 0.0, %v2616
      %v2618 = vpop.f32.mrf.mxu0
      %2619 = vdwg.mxu0
      %2620 = vst [vmem:[%s172] sm:$0xff] %v1982
      %2621 = vst [vmem:[%s172 + $0x8] sm:$0xff] %v1987
      %2622 = vst [vmem:[%s172 + $0x10] sm:$0xff] %v1992
      %2623 = vst [vmem:[%s172 + $0x18] sm:$0xff] %v1997
      %2624 = vst [vmem:[%s172 + $0x20] sm:$0xff] %v2002
      %2625 = vst [vmem:[%s172 + $0x28] sm:$0xff] %v2007
      %2626 = vst [vmem:[%s172 + $0x30] sm:$0xff] %v2012
      %2627 = vst [vmem:[%s172 + $0x38] sm:$0xff] %v2017
      %2628 = vst [vmem:[%s172 + $0x40] sm:$0xff] %v2022
      %2629 = vst [vmem:[%s172 + $0x48] sm:$0xff] %v2027
      %2630 = vst [vmem:[%s172 + $0x50] sm:$0xff] %v2032
      %2631 = vst [vmem:[%s172 + $0x58] sm:$0xff] %v2037
      %2632 = vst [vmem:[%s172 + $0x60] sm:$0xff] %v2042
      %2633 = vst [vmem:[%s172 + $0x68] sm:$0xff] %v2047
      %2634 = vst [vmem:[%s172 + $0x70] sm:$0xff] %v2052
      %2635 = vst [vmem:[%s172 + $0x78] sm:$0xff] %v2057
      %2636 = vst [vmem:[%s172 + $0x80] sm:$0xff] %v2062
      %2637 = vst [vmem:[%s172 + $0x88] sm:$0xff] %v2067
      %2638 = vst [vmem:[%s172 + $0x90] sm:$0xff] %v2072
      %2639 = vst [vmem:[%s172 + $0x98] sm:$0xff] %v2077
      %2640 = vst [vmem:[%s172 + $0xa0] sm:$0xff] %v2082
      %2641 = vst [vmem:[%s172 + $0xa8] sm:$0xff] %v2087
      %2642 = vst [vmem:[%s172 + $0xb0] sm:$0xff] %v2092
      %2643 = vst [vmem:[%s172 + $0xb8] sm:$0xff] %v2097
      %2644 = vst [vmem:[%s172 + $0xc0] sm:$0xff] %v2102
      %2645 = vst [vmem:[%s172 + $0xc8] sm:$0xff] %v2107
      %2646 = vst [vmem:[%s172 + $0xd0] sm:$0xff] %v2112
      %2647 = vst [vmem:[%s172 + $0xd8] sm:$0xff] %v2117
      %2648 = vst [vmem:[%s172 + $0xe0] sm:$0xff] %v2122
      %2649 = vst [vmem:[%s172 + $0xe8] sm:$0xff] %v2127
      %2650 = vst [vmem:[%s172 + $0xf0] sm:$0xff] %v2132
      %2651 = vst [vmem:[%s172 + $0xf8] sm:$0xff] %v2137
      %2652 = vst [vmem:[%s172 + $0x100] sm:$0xff] %v2142
      %2653 = vst [vmem:[%s172 + $0x108] sm:$0xff] %v2147
      %2654 = vst [vmem:[%s172 + $0x110] sm:$0xff] %v2152
      %2655 = vst [vmem:[%s172 + $0x118] sm:$0xff] %v2157
      %2656 = vst [vmem:[%s172 + $0x120] sm:$0xff] %v2162
      %2657 = vst [vmem:[%s172 + $0x128] sm:$0xff] %v2167
      %2658 = vst [vmem:[%s172 + $0x130] sm:$0xff] %v2172
      %2659 = vst [vmem:[%s172 + $0x138] sm:$0xff] %v2177
      %2660 = vst [vmem:[%s172 + $0x140] sm:$0xff] %v2182
      %2661 = vst [vmem:[%s172 + $0x148] sm:$0xff] %v2187
      %2662 = vst [vmem:[%s172 + $0x150] sm:$0xff] %v2192
      %2663 = vst [vmem:[%s172 + $0x158] sm:$0xff] %v2197
      %2664 = vst [vmem:[%s172 + $0x160] sm:$0xff] %v2202
      %2665 = vst [vmem:[%s172 + $0x168] sm:$0xff] %v2207
      %2666 = vst [vmem:[%s172 + $0x170] sm:$0xff] %v2212
      %2667 = vst [vmem:[%s172 + $0x178] sm:$0xff] %v2217
      %2668 = vst [vmem:[%s172 + $0x180] sm:$0xff] %v2222
      %2669 = vst [vmem:[%s172 + $0x188] sm:$0xff] %v2227
      %2670 = vst [vmem:[%s172 + $0x190] sm:$0xff] %v2232
      %2671 = vst [vmem:[%s172 + $0x198] sm:$0xff] %v2237
      %2672 = vst [vmem:[%s172 + $0x1a0] sm:$0xff] %v2242
      %2673 = vst [vmem:[%s172 + $0x1a8] sm:$0xff] %v2247
      %2674 = vst [vmem:[%s172 + $0x1b0] sm:$0xff] %v2252
      %2675 = vst [vmem:[%s172 + $0x1b8] sm:$0xff] %v2257
      %2676 = vst [vmem:[%s172 + $0x1c0] sm:$0xff] %v2262
      %2677 = vst [vmem:[%s172 + $0x1c8] sm:$0xff] %v2267
      %2678 = vst [vmem:[%s172 + $0x1d0] sm:$0xff] %v2272
      %2679 = vst [vmem:[%s172 + $0x1d8] sm:$0xff] %v2277
      %2680 = vst [vmem:[%s172 + $0x1e0] sm:$0xff] %v2282
      %2681 = vst [vmem:[%s172 + $0x1e8] sm:$0xff] %v2287
      %2682 = vst [vmem:[%s172 + $0x1f0] sm:$0xff] %v2292
      %2683 = vst [vmem:[%s172 + $0x1f8] sm:$0xff] %v2297
      %2684 = vst [vmem:[%s172 + $0x200] sm:$0xff] %v2302
      %2685 = vst [vmem:[%s172 + $0x208] sm:$0xff] %v2307
      %2686 = vst [vmem:[%s172 + $0x210] sm:$0xff] %v2312
      %2687 = vst [vmem:[%s172 + $0x218] sm:$0xff] %v2317
      %2688 = vst [vmem:[%s172 + $0x220] sm:$0xff] %v2322
      %2689 = vst [vmem:[%s172 + $0x228] sm:$0xff] %v2327
      %2690 = vst [vmem:[%s172 + $0x230] sm:$0xff] %v2332
      %2691 = vst [vmem:[%s172 + $0x238] sm:$0xff] %v2337
      %2692 = vst [vmem:[%s172 + $0x240] sm:$0xff] %v2342
      %2693 = vst [vmem:[%s172 + $0x248] sm:$0xff] %v2347
      %2694 = vst [vmem:[%s172 + $0x250] sm:$0xff] %v2352
      %2695 = vst [vmem:[%s172 + $0x258] sm:$0xff] %v2357
      %2696 = vst [vmem:[%s172 + $0x260] sm:$0xff] %v2362
      %2697 = vst [vmem:[%s172 + $0x268] sm:$0xff] %v2367
      %2698 = vst [vmem:[%s172 + $0x270] sm:$0xff] %v2372
      %2699 = vst [vmem:[%s172 + $0x278] sm:$0xff] %v2377
      %2700 = vst [vmem:[%s172 + $0x280] sm:$0xff] %v2382
      %2701 = vst [vmem:[%s172 + $0x288] sm:$0xff] %v2387
      %2702 = vst [vmem:[%s172 + $0x290] sm:$0xff] %v2392
      %2703 = vst [vmem:[%s172 + $0x298] sm:$0xff] %v2397
      %2704 = vst [vmem:[%s172 + $0x2a0] sm:$0xff] %v2402
      %2705 = vst [vmem:[%s172 + $0x2a8] sm:$0xff] %v2407
      %2706 = vst [vmem:[%s172 + $0x2b0] sm:$0xff] %v2412
      %2707 = vst [vmem:[%s172 + $0x2b8] sm:$0xff] %v2417
      %2708 = vst [vmem:[%s172 + $0x2c0] sm:$0xff] %v2422
      %2709 = vst [vmem:[%s172 + $0x2c8] sm:$0xff] %v2427
      %2710 = vst [vmem:[%s172 + $0x2d0] sm:$0xff] %v2432
      %2711 = vst [vmem:[%s172 + $0x2d8] sm:$0xff] %v2437
      %2712 = vst [vmem:[%s172 + $0x2e0] sm:$0xff] %v2442
      %2713 = vst [vmem:[%s172 + $0x2e8] sm:$0xff] %v2447
      %2714 = vst [vmem:[%s172 + $0x2f0] sm:$0xff] %v2452
      %2715 = vst [vmem:[%s172 + $0x2f8] sm:$0xff] %v2457
      %2716 = vst [vmem:[%s172 + $0x300] sm:$0xff] %v2462
      %2717 = vst [vmem:[%s172 + $0x308] sm:$0xff] %v2467
      %2718 = vst [vmem:[%s172 + $0x310] sm:$0xff] %v2472
      %2719 = vst [vmem:[%s172 + $0x318] sm:$0xff] %v2477
      %2720 = vst [vmem:[%s172 + $0x320] sm:$0xff] %v2482
      %2721 = vst [vmem:[%s172 + $0x328] sm:$0xff] %v2487
      %2722 = vst [vmem:[%s172 + $0x330] sm:$0xff] %v2492
      %2723 = vst [vmem:[%s172 + $0x338] sm:$0xff] %v2497
      %2724 = vst [vmem:[%s172 + $0x340] sm:$0xff] %v2502
      %2725 = vst [vmem:[%s172 + $0x348] sm:$0xff] %v2507
      %2726 = vst [vmem:[%s172 + $0x350] sm:$0xff] %v2512
      %2727 = vst [vmem:[%s172 + $0x358] sm:$0xff] %v2517
      %2728 = vst [vmem:[%s172 + $0x360] sm:$0xff] %v2522
      %2729 = vst [vmem:[%s172 + $0x368] sm:$0xff] %v2527
      %2730 = vst [vmem:[%s172 + $0x370] sm:$0xff] %v2532
      %2731 = vst [vmem:[%s172 + $0x378] sm:$0xff] %v2537
      %2732 = vst [vmem:[%s172 + $0x380] sm:$0xff] %v2542
      %2733 = vst [vmem:[%s172 + $0x388] sm:$0xff] %v2547
      %2734 = vst [vmem:[%s172 + $0x390] sm:$0xff] %v2552
      %2735 = vst [vmem:[%s172 + $0x398] sm:$0xff] %v2557
      %2736 = vst [vmem:[%s172 + $0x3a0] sm:$0xff] %v2562
      %2737 = vst [vmem:[%s172 + $0x3a8] sm:$0xff] %v2567
      %2738 = vst [vmem:[%s172 + $0x3b0] sm:$0xff] %v2572
      %2739 = vst [vmem:[%s172 + $0x3b8] sm:$0xff] %v2577
      %2740 = vst [vmem:[%s172 + $0x3c0] sm:$0xff] %v2582
      %2741 = vst [vmem:[%s172 + $0x3c8] sm:$0xff] %v2587
      %2742 = vst [vmem:[%s172 + $0x3d0] sm:$0xff] %v2592
      %2743 = vst [vmem:[%s172 + $0x3d8] sm:$0xff] %v2597
      %2744 = vst [vmem:[%s172 + $0x3e0] sm:$0xff] %v2602
      %2745 = vst [vmem:[%s172 + $0x3e8] sm:$0xff] %v2607
      %2746 = vst [vmem:[%s172 + $0x3f0] sm:$0xff] %v2612
      %2747 = vst [vmem:[%s172 + $0x3f8] sm:$0xff] %v2617
      %s2748 = smul.u32 128, %s14
      %p2749 = scmp.lt.s32.totalorder %s2748, 255
      %s2750 = scalar_select %p2749, %s2748, 255
      %s2751 = smul.addr %s2750, 8
      %s2752 = scalar_lea.vmem %s3, %s2751
      // Predicated region
      $region33: #{position_embedding_packed.1} parent=31 // pred_check
        %p2753 = pneg %p100
      $region34: #{position_embedding_packed.1} parent=31 // pred_check_branch
        %2755 = sbr.rel (%p2753) target = $region36
      $region35: #{position_embedding_packed.1} parent=31 // pred_region
        %s2756 = smul.u32 128, %s14
      $region36: #{position_embedding_packed.1} parent=31 // pred_fallthru
        _
    $region32: #{position_embedding_packed.1} parent=5 // pred_fallthru
      _
    %p2757 = scmp.le.s32.totalorder 2, %s9
    // Predicated region
    $region37: #{position_embedding_packed.1} parent=5 // pred_check
      %p2758 = pneg %p2757
    $region38: #{position_embedding_packed.1} parent=5 // pred_check_branch
      %2760 = sbr.rel (%p2758) target = $region40
    $region39: #{position_embedding_packed.1} parent=5 // pred_region
      %s2761 = ssub.s32 %s9, 2
      // Predicated region
      $region41: #{position_embedding_packed.1} parent=39 // pred_check
        %p2762 = pneg %p106
      $region42: #{position_embedding_packed.1} parent=39 // pred_check_branch
        %2764 = sbr.rel (%p2762) target = $region44
      $region43: #{position_embedding_packed.1} parent=39 // pred_region
        %s2765 = smul.u32 128, %s15
        %p2766 = scmp.lt.s32.totalorder %s2765, 255
        %s2767 = scalar_select %p2766, %s2765, 255
        %s2768 = smul.addr %s2767, 8
        %s2769 = scalar_lea.vmem %s3, %s2768
      $region44: #{position_embedding_packed.1} parent=39 // pred_fallthru
        _
    $region40: #{position_embedding_packed.1} parent=5 // pred_fallthru
      _
  $region6: #{position_embedding_packed.1} parent=0 // loop_footer
    %s13 = sadd.s32 1, %s9
  $region7: #{position_embedding_packed.1} parent=0 // loop_footer_branch
    %8 = sbr.rel target = $region3
  $region8: #{position_embedding_packed.1} parent=0 // loop_exit
    _

</llo_original>
